<compile_context>
chip_gen: v6e
topology: v6e:2x2x1
jax: 0.10.0
libtpu: 0.0.40
codegen_flags: <defaults>
</compile_context>

<pallas_src>
from functools import partial

import jax
import jax.numpy as jnp
from jax import lax
from jax.experimental import pallas as pl
from jax.experimental.pallas import tpu as pltpu


def _round_up(x, m):
    return ((x + m - 1) // m) * m


# -----------------------------------------------------------------------------
# Fused kernel: serial tanh recurrence + FC tail.  grid = (batch_blocks, time_blocks).
# -----------------------------------------------------------------------------
def fused_rnn_fc_kernel(x_ref, wih_ref, whh_ref, b_ref, wfc_ref, bfc_ref,
                        out_ref, hs_ref, h_ref):
    """
    x_ref   : [BT, BB, Ep]  embedded inputs for this (time, batch) block (time-major)
    wih_ref : [Ep, Hp]      input->hidden weight (pre-transposed, zero-padded)
    whh_ref : [Hp, Hp]      hidden->hidden weight (zero-padded)
    b_ref   : [1, Hp]       combined bias (b_ih + b_hh, zero-padded)
    wfc_ref : [Hp, Vp]      hidden->vocab weight (pre-transposed, zero-padded)
    bfc_ref : [1, Vp]       FC bias (zero-padded)
    out_ref : [BT, BB, Vp]  logits for this block (time-major)
    hs_ref  : [BT, BB, Hp]  VMEM scratch: pre-activations, then hidden states
    h_ref   : [BB, Hp]      VMEM scratch: hidden state carried across time blocks
    """
    t_blk = pl.program_id(1)

    @pl.when(t_blk == 0)
    def _():
        h_ref[...] = jnp.zeros_like(h_ref)

    BT, BB, Ep = x_ref.shape
    Hp = whh_ref.shape[0]
    Vp = wfc_ref.shape[1]

    # 1) Non-recurrent input projection for the whole time block: one batched MXU
    #    matmul (M = BT*BB rows), hoisted off the serial path.  Bias added once.
    x2d = x_ref[...].reshape(BT * BB, Ep)
    pre = jnp.dot(x2d, wih_ref[...], preferred_element_type=jnp.float32) + b_ref[...]
    hs_ref[...] = pre.reshape(BT, BB, Hp)

    # 2) Serial recurrence.  W_hh streams from VMEM inside the step (no hoisted value
    #    -> no vreg spill at large H); pre-activations read per-step from scratch.
    # TODO(synk): micro-opt (bundle-dump gated): split h @ W_hh into 2 N-chunks so the
    # EUP tanh of chunk 0 overlaps the MXU pushes of chunk 1.
    def step(t, h):
        h_new = jnp.tanh(
            hs_ref[t]
            + jnp.dot(h, whh_ref[...], preferred_element_type=jnp.float32))
        hs_ref[t] = h_new
        return h_new

    h_ref[...] = lax.fori_loop(0, BT, step, h_ref[...], unroll=min(BT, 8))

    # 3) Fused FC tail for the whole block (no HBM round-trip of the hidden states).
    hs2d = hs_ref[...].reshape(BT * BB, Hp)
    logits = (jnp.dot(hs2d, wfc_ref[...], preferred_element_type=jnp.float32)
              + bfc_ref[...])
    out_ref[...] = logits.reshape(BT, BB, Vp).astype(out_ref.dtype)


# -----------------------------------------------------------------------------
# Wrapper
# -----------------------------------------------------------------------------
def rnn_forward_pallas(x_tbe, w_ih, w_hh, b, w_fc, b_fc, *, single_buffer_weights=True):
    """x_tbe: [T, B, E] float32 (time-major, already embedded). Returns [B, T, V]."""
    T, B, E = x_tbe.shape
    H = w_hh.shape[0]
    V = w_fc.shape[1]

    # ---- pad to TPU-friendly shapes: lane dims -> x128, sublane (batch) -> x8 --------
    Ep = _round_up(E, 128)
    Hp = _round_up(H, 128)
    Vp = _round_up(V, 128)
    Bp0 = _round_up(B, 8)

    # ---- explicit VMEM budget (64 MiB on v7x, 128 MiB on v5e/v6e) --------------------
    try:
        vmem_cap = int(pltpu.get_tpu_info().vmem_capacity_bytes)
    except Exception:
        vmem_cap = 64 << 20                      # conservative (v7x-sized) fallback
    vmem_budget = (vmem_cap * 3) // 4            # headroom: ~48 MiB v7x, ~96 MiB v5e/v6e

    # ---- batch block: >=2 blocks when batch allows (feed both v7x TensorCores),
    #      up to 256 rows per serial step to fill the 256-wide MXU on v6e/v7x ----------
    if Bp0 >= 32:
        BB = min(256, _round_up(pl.cdiv(Bp0, 2), 8))
    else:
        BB = Bp0

    weight_bytes = 4 * (Ep * Hp + Hp * Hp + Hp + Hp * Vp + Vp)      # single-buffered

    def vmem_need(bt, bb):
        streams = 2 * 4 * bt * bb * (Ep + Vp)    # double-buffered x + logits blocks
        scratch = 4 * (bt * bb * Hp + bb * Hp)   # hs block + hidden-state carry
        return weight_bytes + streams + scratch

    # ---- time block: balanced (minimal padded serial steps), shrunk to fit VMEM ------
    nt = pl.cdiv(T, 128)
    BT = pl.cdiv(T, nt)
    while BT > 1 and vmem_need(BT, BB) > vmem_budget:
        nt += 1
        BT = pl.cdiv(T, nt)
    while BB > 8 and vmem_need(BT, BB) > vmem_budget:
        BB = max(8, _round_up(BB // 2, 8))
    Bp = _round_up(Bp0, BB)
    Tp = pl.cdiv(T, BT) * BT

    x_p = jnp.pad(x_tbe, ((0, Tp - T), (0, Bp - B), (0, Ep - E)))
    wih_p = jnp.pad(w_ih, ((0, Ep - E), (0, Hp - H)))
    whh_p = jnp.pad(w_hh, ((0, Hp - H), (0, Hp - H)))
    b_p = jnp.pad(b, (0, Hp - H)).reshape(1, Hp)
    wfc_p = jnp.pad(w_fc, ((0, Hp - H), (0, Vp - V)))
    bfc_p = jnp.pad(b_fc, (0, Vp - V)).reshape(1, Vp)

    # Loop-invariant operands: constant index map; single-buffer to save VMEM.
    def invariant_spec(shape):
        idx = lambda bi, ti: (0,) * len(shape)
        if single_buffer_weights:
            return pl.BlockSpec(shape, idx, pipeline_mode=pl.Buffered(1))
        return pl.BlockSpec(shape, idx)

    # TODO(synk): if bit-exact f32 is negotiable (worst on v5e), cast the matmul
    # operands to bf16 with f32 accumulation; kept f32 to match the 1e-4 check.
    logits_tbv = pl.pallas_call(
        fused_rnn_fc_kernel,
        out_shape=jax.ShapeDtypeStruct((Tp, Bp, Vp), jnp.float32),
        grid_spec=pltpu.PrefetchScalarGridSpec(
            num_scalar_prefetch=0,
            grid=(Bp // BB, Tp // BT),
            in_specs=[
                pl.BlockSpec((BT, BB, Ep), lambda bi, ti: (ti, bi, 0)),   # x block
                invariant_spec((Ep, Hp)),                                 # W_ih
                invariant_spec((Hp, Hp)),                                 # W_hh
                invariant_spec((1, Hp)),                                  # b_ih + b_hh
                invariant_spec((Hp, Vp)),                                 # W_fc
                invariant_spec((1, Vp)),                                  # b_fc
            ],
            out_specs=pl.BlockSpec((BT, BB, Vp), lambda bi, ti: (ti, bi, 0)),
            scratch_shapes=[
                pltpu.VMEM((BT, BB, Hp), jnp.float32),   # pre-activations / hidden states
                pltpu.VMEM((BB, Hp), jnp.float32),       # h carried across time blocks
            ],
        ),
        compiler_params=pltpu.CompilerParams(
            dimension_semantics=("parallel", "arbitrary"),
            vmem_limit_bytes=int(vmem_budget),
        ),
    )(x_p, wih_p, whh_p, b_p, wfc_p, bfc_p)

    # ---- unpad + batch_first ----------------------------------------------------------
    # TODO(synk): folding this [T,B,V]->[B,T,V] transpose into the kernel's out_specs
    # would require an in-kernel [BT,BB,*]->[BB,BT,*] relayout; kept as one fused XLA
    # slice+transpose copy instead.
    return jnp.transpose(logits_tbv[:T, :B, :V], (1, 0, 2))


@partial(jax.jit, static_argnames=("single_buffer_weights",))
def simple_rnn_model(tokens, params, single_buffer_weights=True):
    """Full forward: Embedding gather (glue) + fused Pallas recurrence+FC."""
    # TODO(synk): embedding lookup stays a plain-JAX gather (data-dependent HBM gather);
    # gathering time-major avoids any HBM transpose of the embedded activations.
    x_tbe = jnp.take(params["embedding"], tokens.T, axis=0)   # [T, B, E]
    return rnn_forward_pallas(x_tbe, params["w_ih"], params["w_hh"],
                              params["b"], params["w_fc"], params["b_fc"],
                              single_buffer_weights=single_buffer_weights)


def reference_forward(tokens, params):
    """Pure-JAX reference with identical semantics (for correctness check)."""
    emb = jnp.take(params["embedding"], tokens, axis=0)        # [B, T, E]
    B, T, E = emb.shape
    H = params["w_hh"].shape[0]

    def step(h, x_t):
        h_new = jnp.tanh(x_t @ params["w_ih"] + h @ params["w_hh"] + params["b"])
        return h_new, h_new

    _, hs = jax.lax.scan(step, jnp.zeros((B, H), jnp.float32),
                         jnp.transpose(emb, (1, 0, 2)))        # hs: [T, B, H]
    hs = jnp.transpose(hs, (1, 0, 2))                          # [B, T, H]
    return hs @ params["w_fc"] + params["b_fc"]                # [B, T, V]


def init_params(key, vocab_size, embed_size, hidden_size):
    ks = jax.random.split(key, 6)
    scale = 0.1
    return {
        "embedding": scale * jax.random.normal(ks[0], (vocab_size, embed_size), jnp.float32),
        # stored pre-transposed relative to PyTorch ([H,E] -> [E,H], etc.)
        "w_ih": scale * jax.random.normal(ks[1], (embed_size, hidden_size), jnp.float32),
        "w_hh": scale * jax.random.normal(ks[2], (hidden_size, hidden_size), jnp.float32),
        # combined bias = b_ih + b_hh
        "b": scale * jax.random.normal(ks[3], (hidden_size,), jnp.float32),
        "w_fc": scale * jax.random.normal(ks[4], (hidden_size, vocab_size), jnp.float32),
        "b_fc": scale * jax.random.normal(ks[5], (vocab_size,), jnp.float32),
    }


if __name__ == "__main__":
    vocab_size, embed_size, hidden_size = 64, 32, 32
    B, T = 2, 8

    key = jax.random.PRNGKey(0)
    k_param, k_tok = jax.random.split(key)
    params = init_params(k_param, vocab_size, embed_size, hidden_size)
    tokens = jax.random.randint(k_tok, (B, T), 0, vocab_size, dtype=jnp.int32)

    try:
        out = jax.block_until_ready(simple_rnn_model(tokens, params, True))
    except Exception:
        # Graceful fallback if this jax build rejects single-buffering
        # (pipeline_mode=pl.Buffered(1)); everything else is unchanged.
        out = jax.block_until_ready(simple_rnn_model(tokens, params, False))

    ref = jax.block_until_ready(reference_forward(tokens, params))

    assert out.shape == (B, T, vocab_size), out.shape
    assert jnp.allclose(out, ref, atol=1e-4, rtol=1e-4), "mismatch vs JAX reference"

    print("KERNEL_OK")
</pallas_src>

<mosaic_0001>
module attributes {stable_mosaic.version = 11 : i64} {
  func.func @fused_rnn_fc_kernel(%arg0: i32, %arg1: i32, %arg2: memref<8x8x128xf32, #tpu.memory_space<vmem>>, %arg3: memref<128x128xf32, #tpu.memory_space<vmem>>, %arg4: memref<128x128xf32, #tpu.memory_space<vmem>>, %arg5: memref<1x128xf32, #tpu.memory_space<vmem>>, %arg6: memref<128x128xf32, #tpu.memory_space<vmem>>, %arg7: memref<1x128xf32, #tpu.memory_space<vmem>>, %arg8: memref<8x8x128xf32, #tpu.memory_space<vmem>>, %arg9: memref<8x8x128xf32, #tpu.memory_space<vmem>>, %arg10: memref<8x128xf32, #tpu.memory_space<vmem>>) attributes {dimension_semantics = [#tpu.dimension_semantics<parallel>, #tpu.dimension_semantics<arbitrary>], iteration_bounds = array<i64: 1, 1>, scalar_prefetch = 0 : i64, scratch_operands = 2 : i64, tpu.core_type = #tpu.core_type<tc>, window_params = [{transform_indices = @transform_0, window_bounds = array<i64: 8, 8, 128>}, {pipeline_mode = #tpu.pipeline_mode<synchronous>, transform_indices = @transform_1, window_bounds = array<i64: 128, 128>}, {pipeline_mode = #tpu.pipeline_mode<synchronous>, transform_indices = @transform_2, window_bounds = array<i64: 128, 128>}, {pipeline_mode = #tpu.pipeline_mode<synchronous>, transform_indices = @transform_3, window_bounds = array<i64: 1, 128>}, {pipeline_mode = #tpu.pipeline_mode<synchronous>, transform_indices = @transform_4, window_bounds = array<i64: 128, 128>}, {pipeline_mode = #tpu.pipeline_mode<synchronous>, transform_indices = @transform_5, window_bounds = array<i64: 1, 128>}, {transform_indices = @transform_6, window_bounds = array<i64: 8, 8, 128>}]} {
    %c0_i32 = arith.constant 0 : i32
    %0 = arith.cmpi eq, %arg1, %c0_i32 : i32
    %1 = arith.extui %0 : i1 to i32
    %c0_i32_0 = arith.constant 0 : i32
    %2 = arith.cmpi ne, %1, %c0_i32_0 : i32
    scf.if %2 {
      %cst_82 = arith.constant 0.000000e+00 : f32
      %111 = vector.broadcast %cst_82 : f32 to vector<8x128xf32>
      %c0_83 = arith.constant 0 : index
      %c0_84 = arith.constant 0 : index
      %112 = vector.load %arg10[%c0_83, %c0_84] : memref<8x128xf32, #tpu.memory_space<vmem>>, vector<8x128xf32>
      tpu.vector_store %arg10[%c0_83, %c0_84], %111 {strides = array<i32>} : memref<8x128xf32, #tpu.memory_space<vmem>>, vector<8x128xf32>,
    } else {
    }
    %c0 = arith.constant 0 : index
    %c0_1 = arith.constant 0 : index
    %c0_2 = arith.constant 0 : index
    %3 = vector.load %arg2[%c0, %c0_1, %c0_2] : memref<8x8x128xf32, #tpu.memory_space<vmem>>, vector<8x8x128xf32>
    %4 = vector.shape_cast %3 : vector<8x8x128xf32> to vector<64x128xf32>
    %c0_3 = arith.constant 0 : index
    %c0_4 = arith.constant 0 : index
    %5 = vector.load %arg3[%c0_3, %c0_4] : memref<128x128xf32, #tpu.memory_space<vmem>>, vector<128x128xf32>
    %cst = arith.constant dense<0.000000e+00> : vector<64x128xf32>
    %6 = tpu.matmul %4, %5, %cst {dimension_numbers = #tpu.dot_dimension_numbers<[1], [0], [0], [1], [0, 0, 1, 1], [], []>} : vector<64x128xf32>, vector<128x128xf32>, vector<64x128xf32> -> vector<64x128xf32>
    %c0_5 = arith.constant 0 : index
    %c0_6 = arith.constant 0 : index
    %7 = vector.load %arg5[%c0_5, %c0_6] : memref<1x128xf32, #tpu.memory_space<vmem>>, vector<1x128xf32>
    %8 = vector.broadcast %7 : vector<1x128xf32> to vector<64x128xf32>
    %9 = arith.addf %6, %8 : vector<64x128xf32>
    %10 = vector.shape_cast %9 : vector<64x128xf32> to vector<8x8x128xf32>
    %c0_7 = arith.constant 0 : index
    %c0_8 = arith.constant 0 : index
    %c0_9 = arith.constant 0 : index
    %11 = vector.load %arg9[%c0_7, %c0_8, %c0_9] : memref<8x8x128xf32, #tpu.memory_space<vmem>>, vector<8x8x128xf32>
    tpu.vector_store %arg9[%c0_7, %c0_8, %c0_9], %10 {strides = array<i32>} : memref<8x8x128xf32, #tpu.memory_space<vmem>>, vector<8x8x128xf32>,
    %c0_10 = arith.constant 0 : index
    %c0_11 = arith.constant 0 : index
    %12 = vector.load %arg10[%c0_10, %c0_11] : memref<8x128xf32, #tpu.memory_space<vmem>>, vector<8x128xf32>
    %c0_i32_12 = arith.constant 0 : i32
    %13 = arith.index_cast %c0_i32_12 : i32 to index
    %c0_13 = arith.constant 0 : index
    %c0_14 = arith.constant 0 : index
    %14 = vector.load %arg9[%13, %c0_13, %c0_14] : memref<8x8x128xf32, #tpu.memory_space<vmem>>, vector<1x8x128xf32>
    %15 = vector.shape_cast %14 : vector<1x8x128xf32> to vector<8x128xf32>
    %c0_15 = arith.constant 0 : index
    %c0_16 = arith.constant 0 : index
    %16 = vector.load %arg4[%c0_15, %c0_16] : memref<128x128xf32, #tpu.memory_space<vmem>>, vector<128x128xf32>
    %cst_17 = arith.constant dense<0.000000e+00> : vector<8x128xf32>
    %17 = tpu.matmul %12, %16, %cst_17 {dimension_numbers = #tpu.dot_dimension_numbers<[1], [0], [0], [1], [0, 0, 1, 1], [], []>} : vector<8x128xf32>, vector<128x128xf32>, vector<8x128xf32> -> vector<8x128xf32>
    %18 = arith.addf %15, %17 : vector<8x128xf32>
    %19 = math.tanh %18 : vector<8x128xf32>
    %20 = arith.index_cast %c0_i32_12 : i32 to index
    %c0_18 = arith.constant 0 : index
    %c0_19 = arith.constant 0 : index
    %21 = vector.load %arg9[%20, %c0_18, %c0_19] : memref<8x8x128xf32, #tpu.memory_space<vmem>>, vector<1x8x128xf32>
    %22 = vector.shape_cast %21 : vector<1x8x128xf32> to vector<8x128xf32>
    %23 = vector.shape_cast %19 : vector<8x128xf32> to vector<1x8x128xf32>
    tpu.vector_store %arg9[%20, %c0_18, %c0_19], %23 {strides = array<i32>} : memref<8x8x128xf32, #tpu.memory_space<vmem>>, vector<1x8x128xf32>,
    %c1_i32 = arith.constant 1 : i32
    %24 = arith.index_cast %c1_i32 : i32 to index
    %c0_20 = arith.constant 0 : index
    %c0_21 = arith.constant 0 : index
    %25 = vector.load %arg9[%24, %c0_20, %c0_21] : memref<8x8x128xf32, #tpu.memory_space<vmem>>, vector<1x8x128xf32>
    %26 = vector.shape_cast %25 : vector<1x8x128xf32> to vector<8x128xf32>
    %c0_22 = arith.constant 0 : index
    %c0_23 = arith.constant 0 : index
    %27 = vector.load %arg4[%c0_22, %c0_23] : memref<128x128xf32, #tpu.memory_space<vmem>>, vector<128x128xf32>
    %cst_24 = arith.constant dense<0.000000e+00> : vector<8x128xf32>
    %28 = tpu.matmul %19, %27, %cst_24 {dimension_numbers = #tpu.dot_dimension_numbers<[1], [0], [0], [1], [0, 0, 1, 1], [], []>} : vector<8x128xf32>, vector<128x128xf32>, vector<8x128xf32> -> vector<8x128xf32>
    %29 = arith.addf %26, %28 : vector<8x128xf32>
    %30 = math.tanh %29 : vector<8x128xf32>
    %31 = arith.index_cast %c1_i32 : i32 to index
    %c0_25 = arith.constant 0 : index
    %c0_26 = arith.constant 0 : index
    %32 = vector.load %arg9[%31, %c0_25, %c0_26] : memref<8x8x128xf32, #tpu.memory_space<vmem>>, vector<1x8x128xf32>
    %33 = vector.shape_cast %32 : vector<1x8x128xf32> to vector<8x128xf32>
    %34 = vector.shape_cast %30 : vector<8x128xf32> to vector<1x8x128xf32>
    tpu.vector_store %arg9[%31, %c0_25, %c0_26], %34 {strides = array<i32>} : memref<8x8x128xf32, #tpu.memory_space<vmem>>, vector<1x8x128xf32>,
    %c2_i32 = arith.constant 2 : i32
    %35 = arith.index_cast %c2_i32 : i32 to index
    %c0_27 = arith.constant 0 : index
    %c0_28 = arith.constant 0 : index
    %36 = vector.load %arg9[%35, %c0_27, %c0_28] : memref<8x8x128xf32, #tpu.memory_space<vmem>>, vector<1x8x128xf32>
    %37 = vector.shape_cast %36 : vector<1x8x128xf32> to vector<8x128xf32>
    %c0_29 = arith.constant 0 : index
    %c0_30 = arith.constant 0 : index
    %38 = vector.load %arg4[%c0_29, %c0_30] : memref<128x128xf32, #tpu.memory_space<vmem>>, vector<128x128xf32>
    %cst_31 = arith.constant dense<0.000000e+00> : vector<8x128xf32>
    %39 = tpu.matmul %30, %38, %cst_31 {dimension_numbers = #tpu.dot_dimension_numbers<[1], [0], [0], [1], [0, 0, 1, 1], [], []>} : vector<8x128xf32>, vector<128x128xf32>, vector<8x128xf32> -> vector<8x128xf32>
    %40 = arith.addf %37, %39 : vector<8x128xf32>
    %41 = math.tanh %40 : vector<8x128xf32>
    %42 = arith.index_cast %c2_i32 : i32 to index
    %c0_32 = arith.constant 0 : index
    %c0_33 = arith.constant 0 : index
    %43 = vector.load %arg9[%42, %c0_32, %c0_33] : memref<8x8x128xf32, #tpu.memory_space<vmem>>, vector<1x8x128xf32>
    %44 = vector.shape_cast %43 : vector<1x8x128xf32> to vector<8x128xf32>
    %45 = vector.shape_cast %41 : vector<8x128xf32> to vector<1x8x128xf32>
    tpu.vector_store %arg9[%42, %c0_32, %c0_33], %45 {strides = array<i32>} : memref<8x8x128xf32, #tpu.memory_space<vmem>>, vector<1x8x128xf32>,
    %c3_i32 = arith.constant 3 : i32
    %46 = arith.index_cast %c3_i32 : i32 to index
    %c0_34 = arith.constant 0 : index
    %c0_35 = arith.constant 0 : index
    %47 = vector.load %arg9[%46, %c0_34, %c0_35] : memref<8x8x128xf32, #tpu.memory_space<vmem>>, vector<1x8x128xf32>
    %48 = vector.shape_cast %47 : vector<1x8x128xf32> to vector<8x128xf32>
    %c0_36 = arith.constant 0 : index
    %c0_37 = arith.constant 0 : index
    %49 = vector.load %arg4[%c0_36, %c0_37] : memref<128x128xf32, #tpu.memory_space<vmem>>, vector<128x128xf32>
    %cst_38 = arith.constant dense<0.000000e+00> : vector<8x128xf32>
    %50 = tpu.matmul %41, %49, %cst_38 {dimension_numbers = #tpu.dot_dimension_numbers<[1], [0], [0], [1], [0, 0, 1, 1], [], []>} : vector<8x128xf32>, vector<128x128xf32>, vector<8x128xf32> -> vector<8x128xf32>
    %51 = arith.addf %48, %50 : vector<8x128xf32>
    %52 = math.tanh %51 : vector<8x128xf32>
    %53 = arith.index_cast %c3_i32 : i32 to index
    %c0_39 = arith.constant 0 : index
    %c0_40 = arith.constant 0 : index
    %54 = vector.load %arg9[%53, %c0_39, %c0_40] : memref<8x8x128xf32, #tpu.memory_space<vmem>>, vector<1x8x128xf32>
    %55 = vector.shape_cast %54 : vector<1x8x128xf32> to vector<8x128xf32>
    %56 = vector.shape_cast %52 : vector<8x128xf32> to vector<1x8x128xf32>
    tpu.vector_store %arg9[%53, %c0_39, %c0_40], %56 {strides = array<i32>} : memref<8x8x128xf32, #tpu.memory_space<vmem>>, vector<1x8x128xf32>,
    %c4_i32 = arith.constant 4 : i32
    %57 = arith.index_cast %c4_i32 : i32 to index
    %c0_41 = arith.constant 0 : index
    %c0_42 = arith.constant 0 : index
    %58 = vector.load %arg9[%57, %c0_41, %c0_42] : memref<8x8x128xf32, #tpu.memory_space<vmem>>, vector<1x8x128xf32>
    %59 = vector.shape_cast %58 : vector<1x8x128xf32> to vector<8x128xf32>
    %c0_43 = arith.constant 0 : index
    %c0_44 = arith.constant 0 : index
    %60 = vector.load %arg4[%c0_43, %c0_44] : memref<128x128xf32, #tpu.memory_space<vmem>>, vector<128x128xf32>
    %cst_45 = arith.constant dense<0.000000e+00> : vector<8x128xf32>
    %61 = tpu.matmul %52, %60, %cst_45 {dimension_numbers = #tpu.dot_dimension_numbers<[1], [0], [0], [1], [0, 0, 1, 1], [], []>} : vector<8x128xf32>, vector<128x128xf32>, vector<8x128xf32> -> vector<8x128xf32>
    %62 = arith.addf %59, %61 : vector<8x128xf32>
    %63 = math.tanh %62 : vector<8x128xf32>
    %64 = arith.index_cast %c4_i32 : i32 to index
    %c0_46 = arith.constant 0 : index
    %c0_47 = arith.constant 0 : index
    %65 = vector.load %arg9[%64, %c0_46, %c0_47] : memref<8x8x128xf32, #tpu.memory_space<vmem>>, vector<1x8x128xf32>
    %66 = vector.shape_cast %65 : vector<1x8x128xf32> to vector<8x128xf32>
    %67 = vector.shape_cast %63 : vector<8x128xf32> to vector<1x8x128xf32>
    tpu.vector_store %arg9[%64, %c0_46, %c0_47], %67 {strides = array<i32>} : memref<8x8x128xf32, #tpu.memory_space<vmem>>, vector<1x8x128xf32>,
    %c5_i32 = arith.constant 5 : i32
    %68 = arith.index_cast %c5_i32 : i32 to index
    %c0_48 = arith.constant 0 : index
    %c0_49 = arith.constant 0 : index
    %69 = vector.load %arg9[%68, %c0_48, %c0_49] : memref<8x8x128xf32, #tpu.memory_space<vmem>>, vector<1x8x128xf32>
    %70 = vector.shape_cast %69 : vector<1x8x128xf32> to vector<8x128xf32>
    %c0_50 = arith.constant 0 : index
    %c0_51 = arith.constant 0 : index
    %71 = vector.load %arg4[%c0_50, %c0_51] : memref<128x128xf32, #tpu.memory_space<vmem>>, vector<128x128xf32>
    %cst_52 = arith.constant dense<0.000000e+00> : vector<8x128xf32>
    %72 = tpu.matmul %63, %71, %cst_52 {dimension_numbers = #tpu.dot_dimension_numbers<[1], [0], [0], [1], [0, 0, 1, 1], [], []>} : vector<8x128xf32>, vector<128x128xf32>, vector<8x128xf32> -> vector<8x128xf32>
    %73 = arith.addf %70, %72 : vector<8x128xf32>
    %74 = math.tanh %73 : vector<8x128xf32>
    %75 = arith.index_cast %c5_i32 : i32 to index
    %c0_53 = arith.constant 0 : index
    %c0_54 = arith.constant 0 : index
    %76 = vector.load %arg9[%75, %c0_53, %c0_54] : memref<8x8x128xf32, #tpu.memory_space<vmem>>, vector<1x8x128xf32>
    %77 = vector.shape_cast %76 : vector<1x8x128xf32> to vector<8x128xf32>
    %78 = vector.shape_cast %74 : vector<8x128xf32> to vector<1x8x128xf32>
    tpu.vector_store %arg9[%75, %c0_53, %c0_54], %78 {strides = array<i32>} : memref<8x8x128xf32, #tpu.memory_space<vmem>>, vector<1x8x128xf32>,
    %c6_i32 = arith.constant 6 : i32
    %79 = arith.index_cast %c6_i32 : i32 to index
    %c0_55 = arith.constant 0 : index
    %c0_56 = arith.constant 0 : index
    %80 = vector.load %arg9[%79, %c0_55, %c0_56] : memref<8x8x128xf32, #tpu.memory_space<vmem>>, vector<1x8x128xf32>
    %81 = vector.shape_cast %80 : vector<1x8x128xf32> to vector<8x128xf32>
    %c0_57 = arith.constant 0 : index
    %c0_58 = arith.constant 0 : index
    %82 = vector.load %arg4[%c0_57, %c0_58] : memref<128x128xf32, #tpu.memory_space<vmem>>, vector<128x128xf32>
    %cst_59 = arith.constant dense<0.000000e+00> : vector<8x128xf32>
    %83 = tpu.matmul %74, %82, %cst_59 {dimension_numbers = #tpu.dot_dimension_numbers<[1], [0], [0], [1], [0, 0, 1, 1], [], []>} : vector<8x128xf32>, vector<128x128xf32>, vector<8x128xf32> -> vector<8x128xf32>
    %84 = arith.addf %81, %83 : vector<8x128xf32>
    %85 = math.tanh %84 : vector<8x128xf32>
    %86 = arith.index_cast %c6_i32 : i32 to index
    %c0_60 = arith.constant 0 : index
    %c0_61 = arith.constant 0 : index
    %87 = vector.load %arg9[%86, %c0_60, %c0_61] : memref<8x8x128xf32, #tpu.memory_space<vmem>>, vector<1x8x128xf32>
    %88 = vector.shape_cast %87 : vector<1x8x128xf32> to vector<8x128xf32>
    %89 = vector.shape_cast %85 : vector<8x128xf32> to vector<1x8x128xf32>
    tpu.vector_store %arg9[%86, %c0_60, %c0_61], %89 {strides = array<i32>} : memref<8x8x128xf32, #tpu.memory_space<vmem>>, vector<1x8x128xf32>,
    %c7_i32 = arith.constant 7 : i32
    %90 = arith.index_cast %c7_i32 : i32 to index
    %c0_62 = arith.constant 0 : index
    %c0_63 = arith.constant 0 : index
    %91 = vector.load %arg9[%90, %c0_62, %c0_63] : memref<8x8x128xf32, #tpu.memory_space<vmem>>, vector<1x8x128xf32>
    %92 = vector.shape_cast %91 : vector<1x8x128xf32> to vector<8x128xf32>
    %c0_64 = arith.constant 0 : index
    %c0_65 = arith.constant 0 : index
    %93 = vector.load %arg4[%c0_64, %c0_65] : memref<128x128xf32, #tpu.memory_space<vmem>>, vector<128x128xf32>
    %cst_66 = arith.constant dense<0.000000e+00> : vector<8x128xf32>
    %94 = tpu.matmul %85, %93, %cst_66 {dimension_numbers = #tpu.dot_dimension_numbers<[1], [0], [0], [1], [0, 0, 1, 1], [], []>} : vector<8x128xf32>, vector<128x128xf32>, vector<8x128xf32> -> vector<8x128xf32>
    %95 = arith.addf %92, %94 : vector<8x128xf32>
    %96 = math.tanh %95 : vector<8x128xf32>
    %97 = arith.index_cast %c7_i32 : i32 to index
    %c0_67 = arith.constant 0 : index
    %c0_68 = arith.constant 0 : index
    %98 = vector.load %arg9[%97, %c0_67, %c0_68] : memref<8x8x128xf32, #tpu.memory_space<vmem>>, vector<1x8x128xf32>
    %99 = vector.shape_cast %98 : vector<1x8x128xf32> to vector<8x128xf32>
    %100 = vector.shape_cast %96 : vector<8x128xf32> to vector<1x8x128xf32>
    tpu.vector_store %arg9[%97, %c0_67, %c0_68], %100 {strides = array<i32>} : memref<8x8x128xf32, #tpu.memory_space<vmem>>, vector<1x8x128xf32>,
    %c8_i32 = arith.constant 8 : i32
    %c0_69 = arith.constant 0 : index
    %c0_70 = arith.constant 0 : index
    %101 = vector.load %arg10[%c0_69, %c0_70] : memref<8x128xf32, #tpu.memory_space<vmem>>, vector<8x128xf32>
    tpu.vector_store %arg10[%c0_69, %c0_70], %96 {strides = array<i32>} : memref<8x128xf32, #tpu.memory_space<vmem>>, vector<8x128xf32>,
    %c0_71 = arith.constant 0 : index
    %c0_72 = arith.constant 0 : index
    %c0_73 = arith.constant 0 : index
    %102 = vector.load %arg9[%c0_71, %c0_72, %c0_73] : memref<8x8x128xf32, #tpu.memory_space<vmem>>, vector<8x8x128xf32>
    %103 = vector.shape_cast %102 : vector<8x8x128xf32> to vector<64x128xf32>
    %c0_74 = arith.constant 0 : index
    %c0_75 = arith.constant 0 : index
    %104 = vector.load %arg6[%c0_74, %c0_75] : memref<128x128xf32, #tpu.memory_space<vmem>>, vector<128x128xf32>
    %cst_76 = arith.constant dense<0.000000e+00> : vector<64x128xf32>
    %105 = tpu.matmul %103, %104, %cst_76 {dimension_numbers = #tpu.dot_dimension_numbers<[1], [0], [0], [1], [0, 0, 1, 1], [], []>} : vector<64x128xf32>, vector<128x128xf32>, vector<64x128xf32> -> vector<64x128xf32>
    %c0_77 = arith.constant 0 : index
    %c0_78 = arith.constant 0 : index
    %106 = vector.load %arg7[%c0_77, %c0_78] : memref<1x128xf32, #tpu.memory_space<vmem>>, vector<1x128xf32>
    %107 = vector.broadcast %106 : vector<1x128xf32> to vector<64x128xf32>
    %108 = arith.addf %105, %107 : vector<64x128xf32>
    %109 = vector.shape_cast %108 : vector<64x128xf32> to vector<8x8x128xf32>
    %c0_79 = arith.constant 0 : index
    %c0_80 = arith.constant 0 : index
    %c0_81 = arith.constant 0 : index
    %110 = vector.load %arg8[%c0_79, %c0_80, %c0_81] : memref<8x8x128xf32, #tpu.memory_space<vmem>>, vector<8x8x128xf32>
    tpu.vector_store %arg8[%c0_79, %c0_80, %c0_81], %109 {strides = array<i32>} : memref<8x8x128xf32, #tpu.memory_space<vmem>>, vector<8x8x128xf32>,
    return
  }
  func.func @transform_0(%arg0: i32, %arg1: i32) -> (i32, i32, i32) {
    %c0_i32 = arith.constant 0 : i32
    %c0_i32_0 = arith.constant 0 : i32
    return %arg1, %arg0, %c0_i32 : i32, i32, i32
  }
  func.func @transform_1(%arg0: i32, %arg1: i32) -> (i32, i32) {
    %c0_i32 = arith.constant 0 : i32
    %c0_i32_0 = arith.constant 0 : i32
    %c0_i32_1 = arith.constant 0 : i32
    return %c0_i32, %c0_i32_0 : i32, i32
  }
  func.func @transform_2(%arg0: i32, %arg1: i32) -> (i32, i32) {
    %c0_i32 = arith.constant 0 : i32
    %c0_i32_0 = arith.constant 0 : i32
    %c0_i32_1 = arith.constant 0 : i32
    return %c0_i32, %c0_i32_0 : i32, i32
  }
  func.func @transform_3(%arg0: i32, %arg1: i32) -> (i32, i32) {
    %c0_i32 = arith.constant 0 : i32
    %c0_i32_0 = arith.constant 0 : i32
    %c0_i32_1 = arith.constant 0 : i32
    return %c0_i32, %c0_i32_0 : i32, i32
  }
  func.func @transform_4(%arg0: i32, %arg1: i32) -> (i32, i32) {
    %c0_i32 = arith.constant 0 : i32
    %c0_i32_0 = arith.constant 0 : i32
    %c0_i32_1 = arith.constant 0 : i32
    return %c0_i32, %c0_i32_0 : i32, i32
  }
  func.func @transform_5(%arg0: i32, %arg1: i32) -> (i32, i32) {
    %c0_i32 = arith.constant 0 : i32
    %c0_i32_0 = arith.constant 0 : i32
    %c0_i32_1 = arith.constant 0 : i32
    return %c0_i32, %c0_i32_0 : i32, i32
  }
  func.func @transform_6(%arg0: i32, %arg1: i32) -> (i32, i32, i32) {
    %c0_i32 = arith.constant 0 : i32
    %c0_i32_0 = arith.constant 0 : i32
    return %arg1, %arg0, %c0_i32 : i32, i32, i32
  }
}

module attributes {stable_mosaic.version = 11 : i64} {
  func.func @fused_rnn_fc_kernel(%arg0: i32, %arg1: i32, %arg2: memref<8x8x128xf32, #tpu.memory_space<vmem>>, %arg3: memref<128x128xf32, #tpu.memory_space<vmem>>, %arg4: memref<128x128xf32, #tpu.memory_space<vmem>>, %arg5: memref<1x128xf32, #tpu.memory_space<vmem>>, %arg6: memref<128x128xf32, #tpu.memory_space<vmem>>, %arg7: memref<1x128xf32, #tpu.memory_space<vmem>>, %arg8: memref<8x8x128xf32, #tpu.memory_space<vmem>>, %arg9: memref<8x8x128xf32, #tpu.memory_space<vmem>>, %arg10: memref<8x128xf32, #tpu.memory_space<vmem>>) attributes {dimension_semantics = [#tpu.dimension_semantics<parallel>, #tpu.dimension_semantics<arbitrary>], iteration_bounds = array<i64: 1, 1>, scalar_prefetch = 0 : i64, scratch_operands = 2 : i64, tpu.core_type = #tpu.core_type<tc>, window_params = [{transform_indices = @transform_0, window_bounds = array<i64: 8, 8, 128>}, {pipeline_mode = #tpu.pipeline_mode<synchronous>, transform_indices = @transform_1, window_bounds = array<i64: 128, 128>}, {pipeline_mode = #tpu.pipeline_mode<synchronous>, transform_indices = @transform_2, window_bounds = array<i64: 128, 128>}, {pipeline_mode = #tpu.pipeline_mode<synchronous>, transform_indices = @transform_3, window_bounds = array<i64: 1, 128>}, {pipeline_mode = #tpu.pipeline_mode<synchronous>, transform_indices = @transform_4, window_bounds = array<i64: 128, 128>}, {pipeline_mode = #tpu.pipeline_mode<synchronous>, transform_indices = @transform_5, window_bounds = array<i64: 1, 128>}, {transform_indices = @transform_6, window_bounds = array<i64: 8, 8, 128>}]} {
    %c0_i32 = arith.constant 0 : i32
    %0 = arith.cmpi eq, %arg1, %c0_i32 : i32
    %1 = arith.extui %0 : i1 to i32
    %c0_i32_0 = arith.constant 0 : i32
    %2 = arith.cmpi ne, %1, %c0_i32_0 : i32
    scf.if %2 {
      %cst_82 = arith.constant 0.000000e+00 : f32
      %111 = vector.broadcast %cst_82 : f32 to vector<8x128xf32>
      %c0_83 = arith.constant 0 : index
      %c0_84 = arith.constant 0 : index
      %112 = vector.load %arg10[%c0_83, %c0_84] : memref<8x128xf32, #tpu.memory_space<vmem>>, vector<8x128xf32>
      tpu.vector_store %arg10[%c0_83, %c0_84], %111 {strides = array<i32>} : memref<8x128xf32, #tpu.memory_space<vmem>>, vector<8x128xf32>,
    } else {
    }
    %c0 = arith.constant 0 : index
    %c0_1 = arith.constant 0 : index
    %c0_2 = arith.constant 0 : index
    %3 = vector.load %arg2[%c0, %c0_1, %c0_2] : memref<8x8x128xf32, #tpu.memory_space<vmem>>, vector<8x8x128xf32>
    %4 = vector.shape_cast %3 : vector<8x8x128xf32> to vector<64x128xf32>
    %c0_3 = arith.constant 0 : index
    %c0_4 = arith.constant 0 : index
    %5 = vector.load %arg3[%c0_3, %c0_4] : memref<128x128xf32, #tpu.memory_space<vmem>>, vector<128x128xf32>
    %cst = arith.constant dense<0.000000e+00> : vector<64x128xf32>
    %6 = tpu.matmul %4, %5, %cst {dimension_numbers = #tpu.dot_dimension_numbers<[1], [0], [0], [1], [0, 0, 1, 1], [], []>} : vector<64x128xf32>, vector<128x128xf32>, vector<64x128xf32> -> vector<64x128xf32>
    %c0_5 = arith.constant 0 : index
    %c0_6 = arith.constant 0 : index
    %7 = vector.load %arg5[%c0_5, %c0_6] : memref<1x128xf32, #tpu.memory_space<vmem>>, vector<1x128xf32>
    %8 = vector.broadcast %7 : vector<1x128xf32> to vector<64x128xf32>
    %9 = arith.addf %6, %8 : vector<64x128xf32>
    %10 = vector.shape_cast %9 : vector<64x128xf32> to vector<8x8x128xf32>
    %c0_7 = arith.constant 0 : index
    %c0_8 = arith.constant 0 : index
    %c0_9 = arith.constant 0 : index
    %11 = vector.load %arg9[%c0_7, %c0_8, %c0_9] : memref<8x8x128xf32, #tpu.memory_space<vmem>>, vector<8x8x128xf32>
    tpu.vector_store %arg9[%c0_7, %c0_8, %c0_9], %10 {strides = array<i32>} : memref<8x8x128xf32, #tpu.memory_space<vmem>>, vector<8x8x128xf32>,
    %c0_10 = arith.constant 0 : index
    %c0_11 = arith.constant 0 : index
    %12 = vector.load %arg10[%c0_10, %c0_11] : memref<8x128xf32, #tpu.memory_space<vmem>>, vector<8x128xf32>
    %c0_i32_12 = arith.constant 0 : i32
    %13 = arith.index_cast %c0_i32_12 : i32 to index
    %c0_13 = arith.constant 0 : index
    %c0_14 = arith.constant 0 : index
    %14 = vector.load %arg9[%13, %c0_13, %c0_14] : memref<8x8x128xf32, #tpu.memory_space<vmem>>, vector<1x8x128xf32>
    %15 = vector.shape_cast %14 : vector<1x8x128xf32> to vector<8x128xf32>
    %c0_15 = arith.constant 0 : index
    %c0_16 = arith.constant 0 : index
    %16 = vector.load %arg4[%c0_15, %c0_16] : memref<128x128xf32, #tpu.memory_space<vmem>>, vector<128x128xf32>
    %cst_17 = arith.constant dense<0.000000e+00> : vector<8x128xf32>
    %17 = tpu.matmul %12, %16, %cst_17 {dimension_numbers = #tpu.dot_dimension_numbers<[1], [0], [0], [1], [0, 0, 1, 1], [], []>} : vector<8x128xf32>, vector<128x128xf32>, vector<8x128xf32> -> vector<8x128xf32>
    %18 = arith.addf %15, %17 : vector<8x128xf32>
    %19 = math.tanh %18 : vector<8x128xf32>
    %20 = arith.index_cast %c0_i32_12 : i32 to index
    %c0_18 = arith.constant 0 : index
    %c0_19 = arith.constant 0 : index
    %21 = vector.load %arg9[%20, %c0_18, %c0_19] : memref<8x8x128xf32, #tpu.memory_space<vmem>>, vector<1x8x128xf32>
    %22 = vector.shape_cast %21 : vector<1x8x128xf32> to vector<8x128xf32>
    %23 = vector.shape_cast %19 : vector<8x128xf32> to vector<1x8x128xf32>
    tpu.vector_store %arg9[%20, %c0_18, %c0_19], %23 {strides = array<i32>} : memref<8x8x128xf32, #tpu.memory_space<vmem>>, vector<1x8x128xf32>,
    %c1_i32 = arith.constant 1 : i32
    %24 = arith.index_cast %c1_i32 : i32 to index
    %c0_20 = arith.constant 0 : index
    %c0_21 = arith.constant 0 : index
    %25 = vector.load %arg9[%24, %c0_20, %c0_21] : memref<8x8x128xf32, #tpu.memory_space<vmem>>, vector<1x8x128xf32>
    %26 = vector.shape_cast %25 : vector<1x8x128xf32> to vector<8x128xf32>
    %c0_22 = arith.constant 0 : index
    %c0_23 = arith.constant 0 : index
    %27 = vector.load %arg4[%c0_22, %c0_23] : memref<128x128xf32, #tpu.memory_space<vmem>>, vector<128x128xf32>
    %cst_24 = arith.constant dense<0.000000e+00> : vector<8x128xf32>
    %28 = tpu.matmul %19, %27, %cst_24 {dimension_numbers = #tpu.dot_dimension_numbers<[1], [0], [0], [1], [0, 0, 1, 1], [], []>} : vector<8x128xf32>, vector<128x128xf32>, vector<8x128xf32> -> vector<8x128xf32>
    %29 = arith.addf %26, %28 : vector<8x128xf32>
    %30 = math.tanh %29 : vector<8x128xf32>
    %31 = arith.index_cast %c1_i32 : i32 to index
    %c0_25 = arith.constant 0 : index
    %c0_26 = arith.constant 0 : index
    %32 = vector.load %arg9[%31, %c0_25, %c0_26] : memref<8x8x128xf32, #tpu.memory_space<vmem>>, vector<1x8x128xf32>
    %33 = vector.shape_cast %32 : vector<1x8x128xf32> to vector<8x128xf32>
    %34 = vector.shape_cast %30 : vector<8x128xf32> to vector<1x8x128xf32>
    tpu.vector_store %arg9[%31, %c0_25, %c0_26], %34 {strides = array<i32>} : memref<8x8x128xf32, #tpu.memory_space<vmem>>, vector<1x8x128xf32>,
    %c2_i32 = arith.constant 2 : i32
    %35 = arith.index_cast %c2_i32 : i32 to index
    %c0_27 = arith.constant 0 : index
    %c0_28 = arith.constant 0 : index
    %36 = vector.load %arg9[%35, %c0_27, %c0_28] : memref<8x8x128xf32, #tpu.memory_space<vmem>>, vector<1x8x128xf32>
    %37 = vector.shape_cast %36 : vector<1x8x128xf32> to vector<8x128xf32>
    %c0_29 = arith.constant 0 : index
    %c0_30 = arith.constant 0 : index
    %38 = vector.load %arg4[%c0_29, %c0_30] : memref<128x128xf32, #tpu.memory_space<vmem>>, vector<128x128xf32>
    %cst_31 = arith.constant dense<0.000000e+00> : vector<8x128xf32>
    %39 = tpu.matmul %30, %38, %cst_31 {dimension_numbers = #tpu.dot_dimension_numbers<[1], [0], [0], [1], [0, 0, 1, 1], [], []>} : vector<8x128xf32>, vector<128x128xf32>, vector<8x128xf32> -> vector<8x128xf32>
    %40 = arith.addf %37, %39 : vector<8x128xf32>
    %41 = math.tanh %40 : vector<8x128xf32>
    %42 = arith.index_cast %c2_i32 : i32 to index
    %c0_32 = arith.constant 0 : index
    %c0_33 = arith.constant 0 : index
    %43 = vector.load %arg9[%42, %c0_32, %c0_33] : memref<8x8x128xf32, #tpu.memory_space<vmem>>, vector<1x8x128xf32>
    %44 = vector.shape_cast %43 : vector<1x8x128xf32> to vector<8x128xf32>
    %45 = vector.shape_cast %41 : vector<8x128xf32> to vector<1x8x128xf32>
    tpu.vector_store %arg9[%42, %c0_32, %c0_33], %45 {strides = array<i32>} : memref<8x8x128xf32, #tpu.memory_space<vmem>>, vector<1x8x128xf32>,
    %c3_i32 = arith.constant 3 : i32
    %46 = arith.index_cast %c3_i32 : i32 to index
    %c0_34 = arith.constant 0 : index
    %c0_35 = arith.constant 0 : index
    %47 = vector.load %arg9[%46, %c0_34, %c0_35] : memref<8x8x128xf32, #tpu.memory_space<vmem>>, vector<1x8x128xf32>
    %48 = vector.shape_cast %47 : vector<1x8x128xf32> to vector<8x128xf32>
    %c0_36 = arith.constant 0 : index
    %c0_37 = arith.constant 0 : index
    %49 = vector.load %arg4[%c0_36, %c0_37] : memref<128x128xf32, #tpu.memory_space<vmem>>, vector<128x128xf32>
    %cst_38 = arith.constant dense<0.000000e+00> : vector<8x128xf32>
    %50 = tpu.matmul %41, %49, %cst_38 {dimension_numbers = #tpu.dot_dimension_numbers<[1], [0], [0], [1], [0, 0, 1, 1], [], []>} : vector<8x128xf32>, vector<128x128xf32>, vector<8x128xf32> -> vector<8x128xf32>
    %51 = arith.addf %48, %50 : vector<8x128xf32>
    %52 = math.tanh %51 : vector<8x128xf32>
    %53 = arith.index_cast %c3_i32 : i32 to index
    %c0_39 = arith.constant 0 : index
    %c0_40 = arith.constant 0 : index
    %54 = vector.load %arg9[%53, %c0_39, %c0_40] : memref<8x8x128xf32, #tpu.memory_space<vmem>>, vector<1x8x128xf32>
    %55 = vector.shape_cast %54 : vector<1x8x128xf32> to vector<8x128xf32>
    %56 = vector.shape_cast %52 : vector<8x128xf32> to vector<1x8x128xf32>
    tpu.vector_store %arg9[%53, %c0_39, %c0_40], %56 {strides = array<i32>} : memref<8x8x128xf32, #tpu.memory_space<vmem>>, vector<1x8x128xf32>,
    %c4_i32 = arith.constant 4 : i32
    %57 = arith.index_cast %c4_i32 : i32 to index
    %c0_41 = arith.constant 0 : index
    %c0_42 = arith.constant 0 : index
    %58 = vector.load %arg9[%57, %c0_41, %c0_42] : memref<8x8x128xf32, #tpu.memory_space<vmem>>, vector<1x8x128xf32>
    %59 = vector.shape_cast %58 : vector<1x8x128xf32> to vector<8x128xf32>
    %c0_43 = arith.constant 0 : index
    %c0_44 = arith.constant 0 : index
    %60 = vector.load %arg4[%c0_43, %c0_44] : memref<128x128xf32, #tpu.memory_space<vmem>>, vector<128x128xf32>
    %cst_45 = arith.constant dense<0.000000e+00> : vector<8x128xf32>
    %61 = tpu.matmul %52, %60, %cst_45 {dimension_numbers = #tpu.dot_dimension_numbers<[1], [0], [0], [1], [0, 0, 1, 1], [], []>} : vector<8x128xf32>, vector<128x128xf32>, vector<8x128xf32> -> vector<8x128xf32>
    %62 = arith.addf %59, %61 : vector<8x128xf32>
    %63 = math.tanh %62 : vector<8x128xf32>
    %64 = arith.index_cast %c4_i32 : i32 to index
    %c0_46 = arith.constant 0 : index
    %c0_47 = arith.constant 0 : index
    %65 = vector.load %arg9[%64, %c0_46, %c0_47] : memref<8x8x128xf32, #tpu.memory_space<vmem>>, vector<1x8x128xf32>
    %66 = vector.shape_cast %65 : vector<1x8x128xf32> to vector<8x128xf32>
    %67 = vector.shape_cast %63 : vector<8x128xf32> to vector<1x8x128xf32>
    tpu.vector_store %arg9[%64, %c0_46, %c0_47], %67 {strides = array<i32>} : memref<8x8x128xf32, #tpu.memory_space<vmem>>, vector<1x8x128xf32>,
    %c5_i32 = arith.constant 5 : i32
    %68 = arith.index_cast %c5_i32 : i32 to index
    %c0_48 = arith.constant 0 : index
    %c0_49 = arith.constant 0 : index
    %69 = vector.load %arg9[%68, %c0_48, %c0_49] : memref<8x8x128xf32, #tpu.memory_space<vmem>>, vector<1x8x128xf32>
    %70 = vector.shape_cast %69 : vector<1x8x128xf32> to vector<8x128xf32>
    %c0_50 = arith.constant 0 : index
    %c0_51 = arith.constant 0 : index
    %71 = vector.load %arg4[%c0_50, %c0_51] : memref<128x128xf32, #tpu.memory_space<vmem>>, vector<128x128xf32>
    %cst_52 = arith.constant dense<0.000000e+00> : vector<8x128xf32>
    %72 = tpu.matmul %63, %71, %cst_52 {dimension_numbers = #tpu.dot_dimension_numbers<[1], [0], [0], [1], [0, 0, 1, 1], [], []>} : vector<8x128xf32>, vector<128x128xf32>, vector<8x128xf32> -> vector<8x128xf32>
    %73 = arith.addf %70, %72 : vector<8x128xf32>
    %74 = math.tanh %73 : vector<8x128xf32>
    %75 = arith.index_cast %c5_i32 : i32 to index
    %c0_53 = arith.constant 0 : index
    %c0_54 = arith.constant 0 : index
    %76 = vector.load %arg9[%75, %c0_53, %c0_54] : memref<8x8x128xf32, #tpu.memory_space<vmem>>, vector<1x8x128xf32>
    %77 = vector.shape_cast %76 : vector<1x8x128xf32> to vector<8x128xf32>
    %78 = vector.shape_cast %74 : vector<8x128xf32> to vector<1x8x128xf32>
    tpu.vector_store %arg9[%75, %c0_53, %c0_54], %78 {strides = array<i32>} : memref<8x8x128xf32, #tpu.memory_space<vmem>>, vector<1x8x128xf32>,
    %c6_i32 = arith.constant 6 : i32
    %79 = arith.index_cast %c6_i32 : i32 to index
    %c0_55 = arith.constant 0 : index
    %c0_56 = arith.constant 0 : index
    %80 = vector.load %arg9[%79, %c0_55, %c0_56] : memref<8x8x128xf32, #tpu.memory_space<vmem>>, vector<1x8x128xf32>
    %81 = vector.shape_cast %80 : vector<1x8x128xf32> to vector<8x128xf32>
    %c0_57 = arith.constant 0 : index
    %c0_58 = arith.constant 0 : index
    %82 = vector.load %arg4[%c0_57, %c0_58] : memref<128x128xf32, #tpu.memory_space<vmem>>, vector<128x128xf32>
    %cst_59 = arith.constant dense<0.000000e+00> : vector<8x128xf32>
    %83 = tpu.matmul %74, %82, %cst_59 {dimension_numbers = #tpu.dot_dimension_numbers<[1], [0], [0], [1], [0, 0, 1, 1], [], []>} : vector<8x128xf32>, vector<128x128xf32>, vector<8x128xf32> -> vector<8x128xf32>
    %84 = arith.addf %81, %83 : vector<8x128xf32>
    %85 = math.tanh %84 : vector<8x128xf32>
    %86 = arith.index_cast %c6_i32 : i32 to index
    %c0_60 = arith.constant 0 : index
    %c0_61 = arith.constant 0 : index
    %87 = vector.load %arg9[%86, %c0_60, %c0_61] : memref<8x8x128xf32, #tpu.memory_space<vmem>>, vector<1x8x128xf32>
    %88 = vector.shape_cast %87 : vector<1x8x128xf32> to vector<8x128xf32>
    %89 = vector.shape_cast %85 : vector<8x128xf32> to vector<1x8x128xf32>
    tpu.vector_store %arg9[%86, %c0_60, %c0_61], %89 {strides = array<i32>} : memref<8x8x128xf32, #tpu.memory_space<vmem>>, vector<1x8x128xf32>,
    %c7_i32 = arith.constant 7 : i32
    %90 = arith.index_cast %c7_i32 : i32 to index
    %c0_62 = arith.constant 0 : index
    %c0_63 = arith.constant 0 : index
    %91 = vector.load %arg9[%90, %c0_62, %c0_63] : memref<8x8x128xf32, #tpu.memory_space<vmem>>, vector<1x8x128xf32>
    %92 = vector.shape_cast %91 : vector<1x8x128xf32> to vector<8x128xf32>
    %c0_64 = arith.constant 0 : index
    %c0_65 = arith.constant 0 : index
    %93 = vector.load %arg4[%c0_64, %c0_65] : memref<128x128xf32, #tpu.memory_space<vmem>>, vector<128x128xf32>
    %cst_66 = arith.constant dense<0.000000e+00> : vector<8x128xf32>
    %94 = tpu.matmul %85, %93, %cst_66 {dimension_numbers = #tpu.dot_dimension_numbers<[1], [0], [0], [1], [0, 0, 1, 1], [], []>} : vector<8x128xf32>, vector<128x128xf32>, vector<8x128xf32> -> vector<8x128xf32>
    %95 = arith.addf %92, %94 : vector<8x128xf32>
    %96 = math.tanh %95 : vector<8x128xf32>
    %97 = arith.index_cast %c7_i32 : i32 to index
    %c0_67 = arith.constant 0 : index
    %c0_68 = arith.constant 0 : index
    %98 = vector.load %arg9[%97, %c0_67, %c0_68] : memref<8x8x128xf32, #tpu.memory_space<vmem>>, vector<1x8x128xf32>
    %99 = vector.shape_cast %98 : vector<1x8x128xf32> to vector<8x128xf32>
    %100 = vector.shape_cast %96 : vector<8x128xf32> to vector<1x8x128xf32>
    tpu.vector_store %arg9[%97, %c0_67, %c0_68], %100 {strides = array<i32>} : memref<8x8x128xf32, #tpu.memory_space<vmem>>, vector<1x8x128xf32>,
    %c8_i32 = arith.constant 8 : i32
    %c0_69 = arith.constant 0 : index
    %c0_70 = arith.constant 0 : index
    %101 = vector.load %arg10[%c0_69, %c0_70] : memref<8x128xf32, #tpu.memory_space<vmem>>, vector<8x128xf32>
    tpu.vector_store %arg10[%c0_69, %c0_70], %96 {strides = array<i32>} : memref<8x128xf32, #tpu.memory_space<vmem>>, vector<8x128xf32>,
    %c0_71 = arith.constant 0 : index
    %c0_72 = arith.constant 0 : index
    %c0_73 = arith.constant 0 : index
    %102 = vector.load %arg9[%c0_71, %c0_72, %c0_73] : memref<8x8x128xf32, #tpu.memory_space<vmem>>, vector<8x8x128xf32>
    %103 = vector.shape_cast %102 : vector<8x8x128xf32> to vector<64x128xf32>
    %c0_74 = arith.constant 0 : index
    %c0_75 = arith.constant 0 : index
    %104 = vector.load %arg6[%c0_74, %c0_75] : memref<128x128xf32, #tpu.memory_space<vmem>>, vector<128x128xf32>
    %cst_76 = arith.constant dense<0.000000e+00> : vector<64x128xf32>
    %105 = tpu.matmul %103, %104, %cst_76 {dimension_numbers = #tpu.dot_dimension_numbers<[1], [0], [0], [1], [0, 0, 1, 1], [], []>} : vector<64x128xf32>, vector<128x128xf32>, vector<64x128xf32> -> vector<64x128xf32>
    %c0_77 = arith.constant 0 : index
    %c0_78 = arith.constant 0 : index
    %106 = vector.load %arg7[%c0_77, %c0_78] : memref<1x128xf32, #tpu.memory_space<vmem>>, vector<1x128xf32>
    %107 = vector.broadcast %106 : vector<1x128xf32> to vector<64x128xf32>
    %108 = arith.addf %105, %107 : vector<64x128xf32>
    %109 = vector.shape_cast %108 : vector<64x128xf32> to vector<8x8x128xf32>
    %c0_79 = arith.constant 0 : index
    %c0_80 = arith.constant 0 : index
    %c0_81 = arith.constant 0 : index
    %110 = vector.load %arg8[%c0_79, %c0_80, %c0_81] : memref<8x8x128xf32, #tpu.memory_space<vmem>>, vector<8x8x128xf32>
    tpu.vector_store %arg8[%c0_79, %c0_80, %c0_81], %109 {strides = array<i32>} : memref<8x8x128xf32, #tpu.memory_space<vmem>>, vector<8x8x128xf32>,
    return
  }
  func.func @transform_0(%arg0: i32, %arg1: i32) -> (i32, i32, i32) {
    %c0_i32 = arith.constant 0 : i32
    %c0_i32_0 = arith.constant 0 : i32
    return %arg1, %arg0, %c0_i32 : i32, i32, i32
  }
  func.func @transform_1(%arg0: i32, %arg1: i32) -> (i32, i32) {
    %c0_i32 = arith.constant 0 : i32
    %c0_i32_0 = arith.constant 0 : i32
    %c0_i32_1 = arith.constant 0 : i32
    return %c0_i32, %c0_i32_0 : i32, i32
  }
  func.func @transform_2(%arg0: i32, %arg1: i32) -> (i32, i32) {
    %c0_i32 = arith.constant 0 : i32
    %c0_i32_0 = arith.constant 0 : i32
    %c0_i32_1 = arith.constant 0 : i32
    return %c0_i32, %c0_i32_0 : i32, i32
  }
  func.func @transform_3(%arg0: i32, %arg1: i32) -> (i32, i32) {
    %c0_i32 = arith.constant 0 : i32
    %c0_i32_0 = arith.constant 0 : i32
    %c0_i32_1 = arith.constant 0 : i32
    return %c0_i32, %c0_i32_0 : i32, i32
  }
  func.func @transform_4(%arg0: i32, %arg1: i32) -> (i32, i32) {
    %c0_i32 = arith.constant 0 : i32
    %c0_i32_0 = arith.constant 0 : i32
    %c0_i32_1 = arith.constant 0 : i32
    return %c0_i32, %c0_i32_0 : i32, i32
  }
  func.func @transform_5(%arg0: i32, %arg1: i32) -> (i32, i32) {
    %c0_i32 = arith.constant 0 : i32
    %c0_i32_0 = arith.constant 0 : i32
    %c0_i32_1 = arith.constant 0 : i32
    return %c0_i32, %c0_i32_0 : i32, i32
  }
  func.func @transform_6(%arg0: i32, %arg1: i32) -> (i32, i32, i32) {
    %c0_i32 = arith.constant 0 : i32
    %c0_i32_0 = arith.constant 0 : i32
    return %arg1, %arg0, %c0_i32 : i32, i32, i32
  }
}

</mosaic_0001>

<llo_original>
// kernel: simple_rnn_model.1
$region0: #{simple_rnn_model.1}
  #allocation0 [shape = 'u32[]', space=smem, size = 0x4, offset = 0x4, fixed_abs, tag = 'smem constant byte address 0x4 - core index']
  #allocation1 [shape = 'u32[144,128]{1,0:T(1,128)}', space=vmem, size = 0x12000, scoped, tag = 'internal scratch']
  #allocation2 [shape = 'f32[8,8,128]{2,1,0:T(8,128)}', space=vmem, size = 0x8000, scoped, tag = 'scratch operand']
  #allocation3 [shape = 'f32[8,128]{1,0:T(8,128)}', space=vmem, size = 0x1000, scoped, tag = 'scratch operand']
  %s0 = inlined_call_operand.vmem [shape: f32[8,8,128], index: 0, kind: input, shape index: {}]
  %s1 = inlined_call_operand.vmem [shape: f32[128,128], index: 1, kind: input, shape index: {}]
  %s2 = inlined_call_operand.vmem [shape: f32[128,128], index: 2, kind: input, shape index: {}]
  %s3 = inlined_call_operand.vmem [shape: f32[1,128], index: 3, kind: input, shape index: {}]
  %s4 = inlined_call_operand.vmem [shape: f32[128,128], index: 4, kind: input, shape index: {}]
  %s5 = inlined_call_operand.vmem [shape: f32[1,128], index: 5, kind: input, shape index: {}]
  %s6 = inlined_call_operand.vmem [shape: f32[8,8,128], index: 6, kind: output, shape index: {}]
  %s7 = sld [smem:[#allocation0]]
  $region38: #{simple_rnn_model.1} parent=0
    _
  %s9 = ssub.s32 1, %s7
  %s10 = scalar_select 0, %s9, %s7
  // Predicated region
  $region2: #{simple_rnn_model.1} parent=0 // pred_check
    _
  $region3: #{simple_rnn_model.1} parent=0 // pred_check_branch
    %12 = sbr.rel (0) target = $region5
  $region4: #{simple_rnn_model.1} parent=0 // pred_region
    _
  $region5: #{simple_rnn_model.1} parent=0 // pred_fallthru
    _
  // Predicated region
  $region6: #{simple_rnn_model.1} parent=0 // pred_check
    _
  $region7: #{simple_rnn_model.1} parent=0 // pred_check_branch
    %14 = sbr.rel (0) target = $region9
  $region8: #{simple_rnn_model.1} parent=0 // pred_region
    _
  $region9: #{simple_rnn_model.1} parent=0 // pred_fallthru
    _
  // Predicated region
  $region10: #{simple_rnn_model.1} parent=0 // pred_check
    _
  $region11: #{simple_rnn_model.1} parent=0 // pred_check_branch
    %16 = sbr.rel (0) target = $region13
  $region12: #{simple_rnn_model.1} parent=0 // pred_region
    _
  $region13: #{simple_rnn_model.1} parent=0 // pred_fallthru
    _
  // Predicated region
  $region14: #{simple_rnn_model.1} parent=0 // pred_check
    _
  $region15: #{simple_rnn_model.1} parent=0 // pred_check_branch
    %18 = sbr.rel (0) target = $region17
  $region16: #{simple_rnn_model.1} parent=0 // pred_region
    _
  $region17: #{simple_rnn_model.1} parent=0 // pred_fallthru
    _
  // Predicated region
  $region18: #{simple_rnn_model.1} parent=0 // pred_check
    _
  $region19: #{simple_rnn_model.1} parent=0 // pred_check_branch
    %20 = sbr.rel (0) target = $region21
  $region20: #{simple_rnn_model.1} parent=0 // pred_region
    _
  $region21: #{simple_rnn_model.1} parent=0 // pred_fallthru
    _
  // Predicated region
  $region22: #{simple_rnn_model.1} parent=0 // pred_check
    _
  $region23: #{simple_rnn_model.1} parent=0 // pred_check_branch
    %22 = sbr.rel (0) target = $region25
  $region24: #{simple_rnn_model.1} parent=0 // pred_region
    _
  $region25: #{simple_rnn_model.1} parent=0 // pred_fallthru
    _
  %p23 = scmp.eq.s32.totalorder 0, 0
  // Predicated region
  $region26: #{simple_rnn_model.1} parent=0 // pred_check
    %p24 = pneg %p23
  $region27: #{simple_rnn_model.1} parent=0 // pred_check_branch
    %26 = sbr.rel (%p24) target = $region29
  $region28: #{simple_rnn_model.1} parent=0 // pred_region
    %27 = vst [vmem:[#allocation3] sm:$0xff] 0.0
  $region29: #{simple_rnn_model.1} parent=0 // pred_fallthru
    _
  %v28 = vld [vmem:[%s0] sm:$0xff]
  %v29 = vld [vmem:[%s0 + $0x8] sm:$0xff]
  %v30 = vld [vmem:[%s0 + $0x10] sm:$0xff]
  %v31 = vld [vmem:[%s0 + $0x18] sm:$0xff]
  %v32 = vld [vmem:[%s0 + $0x20] sm:$0xff]
  %v33 = vld [vmem:[%s0 + $0x28] sm:$0xff]
  %v34 = vld [vmem:[%s0 + $0x30] sm:$0xff]
  %v35 = vld [vmem:[%s0 + $0x38] sm:$0xff]
  %v36 = vld [vmem:[%s1] sm:$0xff]
  %v37 = vld [vmem:[%s1 + $0x8] sm:$0xff]
  %v38 = vld [vmem:[%s1 + $0x10] sm:$0xff]
  %v39 = vld [vmem:[%s1 + $0x18] sm:$0xff]
  %v40 = vld [vmem:[%s1 + $0x20] sm:$0xff]
  %v41 = vld [vmem:[%s1 + $0x28] sm:$0xff]
  %v42 = vld [vmem:[%s1 + $0x30] sm:$0xff]
  %v43 = vld [vmem:[%s1 + $0x38] sm:$0xff]
  %v44 = vld [vmem:[%s1 + $0x40] sm:$0xff]
  %v45 = vld [vmem:[%s1 + $0x48] sm:$0xff]
  %v46 = vld [vmem:[%s1 + $0x50] sm:$0xff]
  %v47 = vld [vmem:[%s1 + $0x58] sm:$0xff]
  %v48 = vld [vmem:[%s1 + $0x60] sm:$0xff]
  %v49 = vld [vmem:[%s1 + $0x68] sm:$0xff]
  %v50 = vld [vmem:[%s1 + $0x70] sm:$0xff]
  %v51 = vld [vmem:[%s1 + $0x78] sm:$0xff]
  %v52 = vld [vmem:[%s3] sm:$0x1]
  %v54 = vlaneseq
  %v55 = vshrl.u32 %v54, 7
  %v56 = vsub.s32 0, %v55
  %v57 = vrot.slane %v52, %v56
  %59 = vmatprep.subr.mxu0 0.0
  %60 = vmatpush1.msra.mxu0 %v51
  %61 = vmatprep.subr.mxu0 0.0
  %62 = vmatpush1.msra.mxu0 %v50
  %63 = vmatprep.subr.mxu0 0.0
  %64 = vmatpush1.msra.mxu0 %v49
  %65 = vmatprep.subr.mxu0 0.0
  %66 = vmatpush1.msra.mxu0 %v48
  %67 = vmatprep.subr.mxu0 0.0
  %68 = vmatpush1.msra.mxu0 %v47
  %69 = vmatprep.subr.mxu0 0.0
  %70 = vmatpush1.msra.mxu0 %v46
  %71 = vmatprep.subr.mxu0 0.0
  %72 = vmatpush1.msra.mxu0 %v45
  %73 = vmatprep.subr.mxu0 0.0
  %74 = vmatpush1.msra.mxu0 %v44
  %75 = vmatprep.subr.mxu0 0.0
  %76 = vmatpush1.msra.mxu0 %v43
  %77 = vmatprep.subr.mxu0 0.0
  %78 = vmatpush1.msra.mxu0 %v42
  %79 = vmatprep.subr.mxu0 0.0
  %80 = vmatpush1.msra.mxu0 %v41
  %81 = vmatprep.subr.mxu0 0.0
  %82 = vmatpush1.msra.mxu0 %v40
  %83 = vmatprep.subr.mxu0 0.0
  %84 = vmatpush1.msra.mxu0 %v39
  %85 = vmatprep.subr.mxu0 0.0
  %86 = vmatpush1.msra.mxu0 %v38
  %87 = vmatprep.subr.mxu0 0.0
  %88 = vmatpush1.msra.mxu0 %v37
  %89 = vmatprep.subr.mxu0 0.0
  %90 = vmatpush1.msra.mxu0 %v36
  %91 = vmatprep.subr.mxu0 0.0
  %92 = vmatpush2.msra.mxu0 0.0
  %93 = vmatprep.subr.mxu0 0.0
  %94 = vmatpush2.msra.mxu0 0.0
  %95 = vmatprep.subr.mxu0 0.0
  %96 = vmatpush2.msra.mxu0 0.0
  %97 = vmatprep.subr.mxu0 0.0
  %98 = vmatpush2.msra.mxu0 0.0
  %99 = vmatprep.subr.mxu0 0.0
  %100 = vmatpush2.msra.mxu0 0.0
  %101 = vmatprep.subr.mxu0 0.0
  %102 = vmatpush2.msra.mxu0 0.0
  %103 = vmatprep.subr.mxu0 0.0
  %104 = vmatpush2.msra.mxu0 0.0
  %105 = vmatprep.subr.mxu0 0.0
  %106 = vmatpush2.msra.mxu0 0.0
  %107 = vmatprep.subr.mxu0 0.0
  %108 = vmatpush2.msra.mxu0 0.0
  %109 = vmatprep.subr.mxu0 0.0
  %110 = vmatpush2.msra.mxu0 0.0
  %111 = vmatprep.subr.mxu0 0.0
  %112 = vmatpush2.msra.mxu0 0.0
  %113 = vmatprep.subr.mxu0 0.0
  %114 = vmatpush2.msra.mxu0 0.0
  %115 = vmatprep.subr.mxu0 0.0
  %116 = vmatpush2.msra.mxu0 0.0
  %117 = vmatprep.subr.mxu0 0.0
  %118 = vmatpush2.msra.mxu0 0.0
  %119 = vmatprep.subr.mxu0 0.0
  %120 = vmatpush2.msra.mxu0 0.0
  %121 = vmatprep.subr.mxu0 0.0
  %122 = vmatpush2.msra.mxu0 0.0
  %123 = vmatprep.mubr.f32.mxu0 0.0
  %124 = vmatmul.mubr.f32.gmra.mxu0 %v28
  %v125 = vpop.f32.mrf.mxu0
  %v126 = vadd.f32 %v57, %v125
  %v127 = vpop.f32.mrf.mxu0
  %128 = vmatprep.mubr.f32.mxu0 0.0
  %129 = vmatmul.mubr.f32.gmra.mxu0 %v29
  %v130 = vpop.f32.mrf.mxu0
  %v131 = vadd.f32 %v57, %v130
  %v132 = vpop.f32.mrf.mxu0
  %133 = vmatprep.mubr.f32.mxu0 0.0
  %134 = vmatmul.mubr.f32.gmra.mxu0 %v30
  %v135 = vpop.f32.mrf.mxu0
  %v136 = vadd.f32 %v57, %v135
  %v137 = vpop.f32.mrf.mxu0
  %138 = vmatprep.mubr.f32.mxu0 0.0
  %139 = vmatmul.mubr.f32.gmra.mxu0 %v31
  %v140 = vpop.f32.mrf.mxu0
  %v141 = vadd.f32 %v57, %v140
  %v142 = vpop.f32.mrf.mxu0
  %143 = vmatprep.mubr.f32.mxu0 0.0
  %144 = vmatmul.mubr.f32.gmra.mxu0 %v32
  %v145 = vpop.f32.mrf.mxu0
  %v146 = vadd.f32 %v57, %v145
  %v147 = vpop.f32.mrf.mxu0
  %148 = vmatprep.mubr.f32.mxu0 0.0
  %149 = vmatmul.mubr.f32.gmra.mxu0 %v33
  %v150 = vpop.f32.mrf.mxu0
  %v151 = vadd.f32 %v57, %v150
  %v152 = vpop.f32.mrf.mxu0
  %153 = vmatprep.mubr.f32.mxu0 0.0
  %154 = vmatmul.mubr.f32.gmra.mxu0 %v34
  %v155 = vpop.f32.mrf.mxu0
  %v156 = vadd.f32 %v57, %v155
  %v157 = vpop.f32.mrf.mxu0
  %158 = vmatprep.mubr.f32.mxu0 0.0
  %159 = vmatmul.mubr.f32.gmra.mxu0 %v35
  %v160 = vpop.f32.mrf.mxu0
  %v161 = vadd.f32 %v57, %v160
  %v162 = vpop.f32.mrf.mxu0
  %163 = vdwg.mxu0
  %164 = vst [vmem:[#allocation2] sm:$0xff] %v126
  %165 = vst [vmem:[#allocation2 + $0x8] sm:$0xff] %v131
  %166 = vst [vmem:[#allocation2 + $0x10] sm:$0xff] %v136
  %167 = vst [vmem:[#allocation2 + $0x18] sm:$0xff] %v141
  %168 = vst [vmem:[#allocation2 + $0x20] sm:$0xff] %v146
  %169 = vst [vmem:[#allocation2 + $0x28] sm:$0xff] %v151
  %170 = vst [vmem:[#allocation2 + $0x30] sm:$0xff] %v156
  %171 = vst [vmem:[#allocation2 + $0x38] sm:$0xff] %v161
  %v172 = vld [vmem:[#allocation3] sm:$0xff]
  %v173 = vld [vmem:[#allocation2] sm:$0xff]
  %v174 = vld [vmem:[%s2] sm:$0xff]
  %v175 = vld [vmem:[%s2 + $0x8] sm:$0xff]
  %v176 = vld [vmem:[%s2 + $0x10] sm:$0xff]
  %v177 = vld [vmem:[%s2 + $0x18] sm:$0xff]
  %v178 = vld [vmem:[%s2 + $0x20] sm:$0xff]
  %v179 = vld [vmem:[%s2 + $0x28] sm:$0xff]
  %v180 = vld [vmem:[%s2 + $0x30] sm:$0xff]
  %v181 = vld [vmem:[%s2 + $0x38] sm:$0xff]
  %v182 = vld [vmem:[%s2 + $0x40] sm:$0xff]
  %v183 = vld [vmem:[%s2 + $0x48] sm:$0xff]
  %v184 = vld [vmem:[%s2 + $0x50] sm:$0xff]
  %v185 = vld [vmem:[%s2 + $0x58] sm:$0xff]
  %v186 = vld [vmem:[%s2 + $0x60] sm:$0xff]
  %v187 = vld [vmem:[%s2 + $0x68] sm:$0xff]
  %v188 = vld [vmem:[%s2 + $0x70] sm:$0xff]
  %v189 = vld [vmem:[%s2 + $0x78] sm:$0xff]
  %190 = vmatprep.subr.mxu0 0.0
  %191 = vmatpush1.msra.mxu0 %v189
  %192 = vmatprep.subr.mxu0 0.0
  %193 = vmatpush1.msra.mxu0 %v188
  %194 = vmatprep.subr.mxu0 0.0
  %195 = vmatpush1.msra.mxu0 %v187
  %196 = vmatprep.subr.mxu0 0.0
  %197 = vmatpush1.msra.mxu0 %v186
  %198 = vmatprep.subr.mxu0 0.0
  %199 = vmatpush1.msra.mxu0 %v185
  %200 = vmatprep.subr.mxu0 0.0
  %201 = vmatpush1.msra.mxu0 %v184
  %202 = vmatprep.subr.mxu0 0.0
  %203 = vmatpush1.msra.mxu0 %v183
  %204 = vmatprep.subr.mxu0 0.0
  %205 = vmatpush1.msra.mxu0 %v182
  %206 = vmatprep.subr.mxu0 0.0
  %207 = vmatpush1.msra.mxu0 %v181
  %208 = vmatprep.subr.mxu0 0.0
  %209 = vmatpush1.msra.mxu0 %v180
  %210 = vmatprep.subr.mxu0 0.0
  %211 = vmatpush1.msra.mxu0 %v179
  %212 = vmatprep.subr.mxu0 0.0
  %213 = vmatpush1.msra.mxu0 %v178
  %214 = vmatprep.subr.mxu0 0.0
  %215 = vmatpush1.msra.mxu0 %v177
  %216 = vmatprep.subr.mxu0 0.0
  %217 = vmatpush1.msra.mxu0 %v176
  %218 = vmatprep.subr.mxu0 0.0
  %219 = vmatpush1.msra.mxu0 %v175
  %220 = vmatprep.subr.mxu0 0.0
  %221 = vmatpush1.msra.mxu0 %v174
  %222 = vmatprep.subr.mxu0 0.0
  %223 = vmatpush2.msra.mxu0 0.0
  %224 = vmatprep.subr.mxu0 0.0
  %225 = vmatpush2.msra.mxu0 0.0
  %226 = vmatprep.subr.mxu0 0.0
  %227 = vmatpush2.msra.mxu0 0.0
  %228 = vmatprep.subr.mxu0 0.0
  %229 = vmatpush2.msra.mxu0 0.0
  %230 = vmatprep.subr.mxu0 0.0
  %231 = vmatpush2.msra.mxu0 0.0
  %232 = vmatprep.subr.mxu0 0.0
  %233 = vmatpush2.msra.mxu0 0.0
  %234 = vmatprep.subr.mxu0 0.0
  %235 = vmatpush2.msra.mxu0 0.0
  %236 = vmatprep.subr.mxu0 0.0
  %237 = vmatpush2.msra.mxu0 0.0
  %238 = vmatprep.subr.mxu0 0.0
  %239 = vmatpush2.msra.mxu0 0.0
  %240 = vmatprep.subr.mxu0 0.0
  %241 = vmatpush2.msra.mxu0 0.0
  %242 = vmatprep.subr.mxu0 0.0
  %243 = vmatpush2.msra.mxu0 0.0
  %244 = vmatprep.subr.mxu0 0.0
  %245 = vmatpush2.msra.mxu0 0.0
  %246 = vmatprep.subr.mxu0 0.0
  %247 = vmatpush2.msra.mxu0 0.0
  %248 = vmatprep.subr.mxu0 0.0
  %249 = vmatpush2.msra.mxu0 0.0
  %250 = vmatprep.subr.mxu0 0.0
  %251 = vmatpush2.msra.mxu0 0.0
  %252 = vmatprep.subr.mxu0 0.0
  %253 = vmatpush2.msra.mxu0 0.0
  %254 = vmatprep.mubr.f32.mxu0 0.0
  %255 = vmatmul.mubr.f32.gmra.mxu0 %v172
  %v256 = vpop.f32.mrf.mxu0
  %v257 = vadd.f32 0.0, %v256
  %v258 = vpop.f32.mrf.mxu0
  %259 = vdwg.mxu0
  %v260 = vadd.f32 %v173, %v257
  %v261 = vtanh.pop %v260
  %262 = vst [vmem:[#allocation2] sm:$0xff] %v261
  %s263 = scalar_lea.vmem [#allocation2], 8
  %v264 = vld [vmem:[%s263] sm:$0xff]
  %v265 = vld [vmem:[%s2] sm:$0xff]
  %v266 = vld [vmem:[%s2 + $0x8] sm:$0xff]
  %v267 = vld [vmem:[%s2 + $0x10] sm:$0xff]
  %v268 = vld [vmem:[%s2 + $0x18] sm:$0xff]
  %v269 = vld [vmem:[%s2 + $0x20] sm:$0xff]
  %v270 = vld [vmem:[%s2 + $0x28] sm:$0xff]
  %v271 = vld [vmem:[%s2 + $0x30] sm:$0xff]
  %v272 = vld [vmem:[%s2 + $0x38] sm:$0xff]
  %v273 = vld [vmem:[%s2 + $0x40] sm:$0xff]
  %v274 = vld [vmem:[%s2 + $0x48] sm:$0xff]
  %v275 = vld [vmem:[%s2 + $0x50] sm:$0xff]
  %v276 = vld [vmem:[%s2 + $0x58] sm:$0xff]
  %v277 = vld [vmem:[%s2 + $0x60] sm:$0xff]
  %v278 = vld [vmem:[%s2 + $0x68] sm:$0xff]
  %v279 = vld [vmem:[%s2 + $0x70] sm:$0xff]
  %v280 = vld [vmem:[%s2 + $0x78] sm:$0xff]
  %281 = vmatprep.subr.mxu0 0.0
  %282 = vmatpush1.msra.mxu0 %v280
  %283 = vmatprep.subr.mxu0 0.0
  %284 = vmatpush1.msra.mxu0 %v279
  %285 = vmatprep.subr.mxu0 0.0
  %286 = vmatpush1.msra.mxu0 %v278
  %287 = vmatprep.subr.mxu0 0.0
  %288 = vmatpush1.msra.mxu0 %v277
  %289 = vmatprep.subr.mxu0 0.0
  %290 = vmatpush1.msra.mxu0 %v276
  %291 = vmatprep.subr.mxu0 0.0
  %292 = vmatpush1.msra.mxu0 %v275
  %293 = vmatprep.subr.mxu0 0.0
  %294 = vmatpush1.msra.mxu0 %v274
  %295 = vmatprep.subr.mxu0 0.0
  %296 = vmatpush1.msra.mxu0 %v273
  %297 = vmatprep.subr.mxu0 0.0
  %298 = vmatpush1.msra.mxu0 %v272
  %299 = vmatprep.subr.mxu0 0.0
  %300 = vmatpush1.msra.mxu0 %v271
  %301 = vmatprep.subr.mxu0 0.0
  %302 = vmatpush1.msra.mxu0 %v270
  %303 = vmatprep.subr.mxu0 0.0
  %304 = vmatpush1.msra.mxu0 %v269
  %305 = vmatprep.subr.mxu0 0.0
  %306 = vmatpush1.msra.mxu0 %v268
  %307 = vmatprep.subr.mxu0 0.0
  %308 = vmatpush1.msra.mxu0 %v267
  %309 = vmatprep.subr.mxu0 0.0
  %310 = vmatpush1.msra.mxu0 %v266
  %311 = vmatprep.subr.mxu0 0.0
  %312 = vmatpush1.msra.mxu0 %v265
  %313 = vmatprep.subr.mxu0 0.0
  %314 = vmatpush2.msra.mxu0 0.0
  %315 = vmatprep.subr.mxu0 0.0
  %316 = vmatpush2.msra.mxu0 0.0
  %317 = vmatprep.subr.mxu0 0.0
  %318 = vmatpush2.msra.mxu0 0.0
  %319 = vmatprep.subr.mxu0 0.0
  %320 = vmatpush2.msra.mxu0 0.0
  %321 = vmatprep.subr.mxu0 0.0
  %322 = vmatpush2.msra.mxu0 0.0
  %323 = vmatprep.subr.mxu0 0.0
  %324 = vmatpush2.msra.mxu0 0.0
  %325 = vmatprep.subr.mxu0 0.0
  %326 = vmatpush2.msra.mxu0 0.0
  %327 = vmatprep.subr.mxu0 0.0
  %328 = vmatpush2.msra.mxu0 0.0
  %329 = vmatprep.subr.mxu0 0.0
  %330 = vmatpush2.msra.mxu0 0.0
  %331 = vmatprep.subr.mxu0 0.0
  %332 = vmatpush2.msra.mxu0 0.0
  %333 = vmatprep.subr.mxu0 0.0
  %334 = vmatpush2.msra.mxu0 0.0
  %335 = vmatprep.subr.mxu0 0.0
  %336 = vmatpush2.msra.mxu0 0.0
  %337 = vmatprep.subr.mxu0 0.0
  %338 = vmatpush2.msra.mxu0 0.0
  %339 = vmatprep.subr.mxu0 0.0
  %340 = vmatpush2.msra.mxu0 0.0
  %341 = vmatprep.subr.mxu0 0.0
  %342 = vmatpush2.msra.mxu0 0.0
  %343 = vmatprep.subr.mxu0 0.0
  %344 = vmatpush2.msra.mxu0 0.0
  %345 = vmatprep.mubr.f32.mxu0 0.0
  %346 = vmatmul.mubr.f32.gmra.mxu0 %v261
  %v347 = vpop.f32.mrf.mxu0
  %v348 = vadd.f32 0.0, %v347
  %v349 = vpop.f32.mrf.mxu0
  %350 = vdwg.mxu0
  %v351 = vadd.f32 %v264, %v348
  %v352 = vtanh.pop %v351
  %353 = vst [vmem:[%s263] sm:$0xff] %v352
  %s354 = scalar_lea.vmem [#allocation2], 16
  %v355 = vld [vmem:[%s354] sm:$0xff]
  %v356 = vld [vmem:[%s2] sm:$0xff]
  %v357 = vld [vmem:[%s2 + $0x8] sm:$0xff]
  %v358 = vld [vmem:[%s2 + $0x10] sm:$0xff]
  %v359 = vld [vmem:[%s2 + $0x18] sm:$0xff]
  %v360 = vld [vmem:[%s2 + $0x20] sm:$0xff]
  %v361 = vld [vmem:[%s2 + $0x28] sm:$0xff]
  %v362 = vld [vmem:[%s2 + $0x30] sm:$0xff]
  %v363 = vld [vmem:[%s2 + $0x38] sm:$0xff]
  %v364 = vld [vmem:[%s2 + $0x40] sm:$0xff]
  %v365 = vld [vmem:[%s2 + $0x48] sm:$0xff]
  %v366 = vld [vmem:[%s2 + $0x50] sm:$0xff]
  %v367 = vld [vmem:[%s2 + $0x58] sm:$0xff]
  %v368 = vld [vmem:[%s2 + $0x60] sm:$0xff]
  %v369 = vld [vmem:[%s2 + $0x68] sm:$0xff]
  %v370 = vld [vmem:[%s2 + $0x70] sm:$0xff]
  %v371 = vld [vmem:[%s2 + $0x78] sm:$0xff]
  %372 = vmatprep.subr.mxu0 0.0
  %373 = vmatpush1.msra.mxu0 %v371
  %374 = vmatprep.subr.mxu0 0.0
  %375 = vmatpush1.msra.mxu0 %v370
  %376 = vmatprep.subr.mxu0 0.0
  %377 = vmatpush1.msra.mxu0 %v369
  %378 = vmatprep.subr.mxu0 0.0
  %379 = vmatpush1.msra.mxu0 %v368
  %380 = vmatprep.subr.mxu0 0.0
  %381 = vmatpush1.msra.mxu0 %v367
  %382 = vmatprep.subr.mxu0 0.0
  %383 = vmatpush1.msra.mxu0 %v366
  %384 = vmatprep.subr.mxu0 0.0
  %385 = vmatpush1.msra.mxu0 %v365
  %386 = vmatprep.subr.mxu0 0.0
  %387 = vmatpush1.msra.mxu0 %v364
  %388 = vmatprep.subr.mxu0 0.0
  %389 = vmatpush1.msra.mxu0 %v363
  %390 = vmatprep.subr.mxu0 0.0
  %391 = vmatpush1.msra.mxu0 %v362
  %392 = vmatprep.subr.mxu0 0.0
  %393 = vmatpush1.msra.mxu0 %v361
  %394 = vmatprep.subr.mxu0 0.0
  %395 = vmatpush1.msra.mxu0 %v360
  %396 = vmatprep.subr.mxu0 0.0
  %397 = vmatpush1.msra.mxu0 %v359
  %398 = vmatprep.subr.mxu0 0.0
  %399 = vmatpush1.msra.mxu0 %v358
  %400 = vmatprep.subr.mxu0 0.0
  %401 = vmatpush1.msra.mxu0 %v357
  %402 = vmatprep.subr.mxu0 0.0
  %403 = vmatpush1.msra.mxu0 %v356
  %404 = vmatprep.subr.mxu0 0.0
  %405 = vmatpush2.msra.mxu0 0.0
  %406 = vmatprep.subr.mxu0 0.0
  %407 = vmatpush2.msra.mxu0 0.0
  %408 = vmatprep.subr.mxu0 0.0
  %409 = vmatpush2.msra.mxu0 0.0
  %410 = vmatprep.subr.mxu0 0.0
  %411 = vmatpush2.msra.mxu0 0.0
  %412 = vmatprep.subr.mxu0 0.0
  %413 = vmatpush2.msra.mxu0 0.0
  %414 = vmatprep.subr.mxu0 0.0
  %415 = vmatpush2.msra.mxu0 0.0
  %416 = vmatprep.subr.mxu0 0.0
  %417 = vmatpush2.msra.mxu0 0.0
  %418 = vmatprep.subr.mxu0 0.0
  %419 = vmatpush2.msra.mxu0 0.0
  %420 = vmatprep.subr.mxu0 0.0
  %421 = vmatpush2.msra.mxu0 0.0
  %422 = vmatprep.subr.mxu0 0.0
  %423 = vmatpush2.msra.mxu0 0.0
  %424 = vmatprep.subr.mxu0 0.0
  %425 = vmatpush2.msra.mxu0 0.0
  %426 = vmatprep.subr.mxu0 0.0
  %427 = vmatpush2.msra.mxu0 0.0
  %428 = vmatprep.subr.mxu0 0.0
  %429 = vmatpush2.msra.mxu0 0.0
  %430 = vmatprep.subr.mxu0 0.0
  %431 = vmatpush2.msra.mxu0 0.0
  %432 = vmatprep.subr.mxu0 0.0
  %433 = vmatpush2.msra.mxu0 0.0
  %434 = vmatprep.subr.mxu0 0.0
  %435 = vmatpush2.msra.mxu0 0.0
  %436 = vmatprep.mubr.f32.mxu0 0.0
  %437 = vmatmul.mubr.f32.gmra.mxu0 %v352
  %v438 = vpop.f32.mrf.mxu0
  %v439 = vadd.f32 0.0, %v438
  %v440 = vpop.f32.mrf.mxu0
  %441 = vdwg.mxu0
  %v442 = vadd.f32 %v355, %v439
  %v443 = vtanh.pop %v442
  %444 = vst [vmem:[%s354] sm:$0xff] %v443
  %s445 = scalar_lea.vmem [#allocation2], 24
  %v446 = vld [vmem:[%s445] sm:$0xff]
  %v447 = vld [vmem:[%s2] sm:$0xff]
  %v448 = vld [vmem:[%s2 + $0x8] sm:$0xff]
  %v449 = vld [vmem:[%s2 + $0x10] sm:$0xff]
  %v450 = vld [vmem:[%s2 + $0x18] sm:$0xff]
  %v451 = vld [vmem:[%s2 + $0x20] sm:$0xff]
  %v452 = vld [vmem:[%s2 + $0x28] sm:$0xff]
  %v453 = vld [vmem:[%s2 + $0x30] sm:$0xff]
  %v454 = vld [vmem:[%s2 + $0x38] sm:$0xff]
  %v455 = vld [vmem:[%s2 + $0x40] sm:$0xff]
  %v456 = vld [vmem:[%s2 + $0x48] sm:$0xff]
  %v457 = vld [vmem:[%s2 + $0x50] sm:$0xff]
  %v458 = vld [vmem:[%s2 + $0x58] sm:$0xff]
  %v459 = vld [vmem:[%s2 + $0x60] sm:$0xff]
  %v460 = vld [vmem:[%s2 + $0x68] sm:$0xff]
  %v461 = vld [vmem:[%s2 + $0x70] sm:$0xff]
  %v462 = vld [vmem:[%s2 + $0x78] sm:$0xff]
  %463 = vmatprep.subr.mxu0 0.0
  %464 = vmatpush1.msra.mxu0 %v462
  %465 = vmatprep.subr.mxu0 0.0
  %466 = vmatpush1.msra.mxu0 %v461
  %467 = vmatprep.subr.mxu0 0.0
  %468 = vmatpush1.msra.mxu0 %v460
  %469 = vmatprep.subr.mxu0 0.0
  %470 = vmatpush1.msra.mxu0 %v459
  %471 = vmatprep.subr.mxu0 0.0
  %472 = vmatpush1.msra.mxu0 %v458
  %473 = vmatprep.subr.mxu0 0.0
  %474 = vmatpush1.msra.mxu0 %v457
  %475 = vmatprep.subr.mxu0 0.0
  %476 = vmatpush1.msra.mxu0 %v456
  %477 = vmatprep.subr.mxu0 0.0
  %478 = vmatpush1.msra.mxu0 %v455
  %479 = vmatprep.subr.mxu0 0.0
  %480 = vmatpush1.msra.mxu0 %v454
  %481 = vmatprep.subr.mxu0 0.0
  %482 = vmatpush1.msra.mxu0 %v453
  %483 = vmatprep.subr.mxu0 0.0
  %484 = vmatpush1.msra.mxu0 %v452
  %485 = vmatprep.subr.mxu0 0.0
  %486 = vmatpush1.msra.mxu0 %v451
  %487 = vmatprep.subr.mxu0 0.0
  %488 = vmatpush1.msra.mxu0 %v450
  %489 = vmatprep.subr.mxu0 0.0
  %490 = vmatpush1.msra.mxu0 %v449
  %491 = vmatprep.subr.mxu0 0.0
  %492 = vmatpush1.msra.mxu0 %v448
  %493 = vmatprep.subr.mxu0 0.0
  %494 = vmatpush1.msra.mxu0 %v447
  %495 = vmatprep.subr.mxu0 0.0
  %496 = vmatpush2.msra.mxu0 0.0
  %497 = vmatprep.subr.mxu0 0.0
  %498 = vmatpush2.msra.mxu0 0.0
  %499 = vmatprep.subr.mxu0 0.0
  %500 = vmatpush2.msra.mxu0 0.0
  %501 = vmatprep.subr.mxu0 0.0
  %502 = vmatpush2.msra.mxu0 0.0
  %503 = vmatprep.subr.mxu0 0.0
  %504 = vmatpush2.msra.mxu0 0.0
  %505 = vmatprep.subr.mxu0 0.0
  %506 = vmatpush2.msra.mxu0 0.0
  %507 = vmatprep.subr.mxu0 0.0
  %508 = vmatpush2.msra.mxu0 0.0
  %509 = vmatprep.subr.mxu0 0.0
  %510 = vmatpush2.msra.mxu0 0.0
  %511 = vmatprep.subr.mxu0 0.0
  %512 = vmatpush2.msra.mxu0 0.0
  %513 = vmatprep.subr.mxu0 0.0
  %514 = vmatpush2.msra.mxu0 0.0
  %515 = vmatprep.subr.mxu0 0.0
  %516 = vmatpush2.msra.mxu0 0.0
  %517 = vmatprep.subr.mxu0 0.0
  %518 = vmatpush2.msra.mxu0 0.0
  %519 = vmatprep.subr.mxu0 0.0
  %520 = vmatpush2.msra.mxu0 0.0
  %521 = vmatprep.subr.mxu0 0.0
  %522 = vmatpush2.msra.mxu0 0.0
  %523 = vmatprep.subr.mxu0 0.0
  %524 = vmatpush2.msra.mxu0 0.0
  %525 = vmatprep.subr.mxu0 0.0
  %526 = vmatpush2.msra.mxu0 0.0
  %527 = vmatprep.mubr.f32.mxu0 0.0
  %528 = vmatmul.mubr.f32.gmra.mxu0 %v443
  %v529 = vpop.f32.mrf.mxu0
  %v530 = vadd.f32 0.0, %v529
  %v531 = vpop.f32.mrf.mxu0
  %532 = vdwg.mxu0
  %v533 = vadd.f32 %v446, %v530
  %v534 = vtanh.pop %v533
  %535 = vst [vmem:[%s445] sm:$0xff] %v534
  %s536 = scalar_lea.vmem [#allocation2], 32
  %v537 = vld [vmem:[%s536] sm:$0xff]
  %v538 = vld [vmem:[%s2] sm:$0xff]
  %v539 = vld [vmem:[%s2 + $0x8] sm:$0xff]
  %v540 = vld [vmem:[%s2 + $0x10] sm:$0xff]
  %v541 = vld [vmem:[%s2 + $0x18] sm:$0xff]
  %v542 = vld [vmem:[%s2 + $0x20] sm:$0xff]
  %v543 = vld [vmem:[%s2 + $0x28] sm:$0xff]
  %v544 = vld [vmem:[%s2 + $0x30] sm:$0xff]
  %v545 = vld [vmem:[%s2 + $0x38] sm:$0xff]
  %v546 = vld [vmem:[%s2 + $0x40] sm:$0xff]
  %v547 = vld [vmem:[%s2 + $0x48] sm:$0xff]
  %v548 = vld [vmem:[%s2 + $0x50] sm:$0xff]
  %v549 = vld [vmem:[%s2 + $0x58] sm:$0xff]
  %v550 = vld [vmem:[%s2 + $0x60] sm:$0xff]
  %v551 = vld [vmem:[%s2 + $0x68] sm:$0xff]
  %v552 = vld [vmem:[%s2 + $0x70] sm:$0xff]
  %v553 = vld [vmem:[%s2 + $0x78] sm:$0xff]
  %554 = vmatprep.subr.mxu0 0.0
  %555 = vmatpush1.msra.mxu0 %v553
  %556 = vmatprep.subr.mxu0 0.0
  %557 = vmatpush1.msra.mxu0 %v552
  %558 = vmatprep.subr.mxu0 0.0
  %559 = vmatpush1.msra.mxu0 %v551
  %560 = vmatprep.subr.mxu0 0.0
  %561 = vmatpush1.msra.mxu0 %v550
  %562 = vmatprep.subr.mxu0 0.0
  %563 = vmatpush1.msra.mxu0 %v549
  %564 = vmatprep.subr.mxu0 0.0
  %565 = vmatpush1.msra.mxu0 %v548
  %566 = vmatprep.subr.mxu0 0.0
  %567 = vmatpush1.msra.mxu0 %v547
  %568 = vmatprep.subr.mxu0 0.0
  %569 = vmatpush1.msra.mxu0 %v546
  %570 = vmatprep.subr.mxu0 0.0
  %571 = vmatpush1.msra.mxu0 %v545
  %572 = vmatprep.subr.mxu0 0.0
  %573 = vmatpush1.msra.mxu0 %v544
  %574 = vmatprep.subr.mxu0 0.0
  %575 = vmatpush1.msra.mxu0 %v543
  %576 = vmatprep.subr.mxu0 0.0
  %577 = vmatpush1.msra.mxu0 %v542
  %578 = vmatprep.subr.mxu0 0.0
  %579 = vmatpush1.msra.mxu0 %v541
  %580 = vmatprep.subr.mxu0 0.0
  %581 = vmatpush1.msra.mxu0 %v540
  %582 = vmatprep.subr.mxu0 0.0
  %583 = vmatpush1.msra.mxu0 %v539
  %584 = vmatprep.subr.mxu0 0.0
  %585 = vmatpush1.msra.mxu0 %v538
  %586 = vmatprep.subr.mxu0 0.0
  %587 = vmatpush2.msra.mxu0 0.0
  %588 = vmatprep.subr.mxu0 0.0
  %589 = vmatpush2.msra.mxu0 0.0
  %590 = vmatprep.subr.mxu0 0.0
  %591 = vmatpush2.msra.mxu0 0.0
  %592 = vmatprep.subr.mxu0 0.0
  %593 = vmatpush2.msra.mxu0 0.0
  %594 = vmatprep.subr.mxu0 0.0
  %595 = vmatpush2.msra.mxu0 0.0
  %596 = vmatprep.subr.mxu0 0.0
  %597 = vmatpush2.msra.mxu0 0.0
  %598 = vmatprep.subr.mxu0 0.0
  %599 = vmatpush2.msra.mxu0 0.0
  %600 = vmatprep.subr.mxu0 0.0
  %601 = vmatpush2.msra.mxu0 0.0
  %602 = vmatprep.subr.mxu0 0.0
  %603 = vmatpush2.msra.mxu0 0.0
  %604 = vmatprep.subr.mxu0 0.0
  %605 = vmatpush2.msra.mxu0 0.0
  %606 = vmatprep.subr.mxu0 0.0
  %607 = vmatpush2.msra.mxu0 0.0
  %608 = vmatprep.subr.mxu0 0.0
  %609 = vmatpush2.msra.mxu0 0.0
  %610 = vmatprep.subr.mxu0 0.0
  %611 = vmatpush2.msra.mxu0 0.0
  %612 = vmatprep.subr.mxu0 0.0
  %613 = vmatpush2.msra.mxu0 0.0
  %614 = vmatprep.subr.mxu0 0.0
  %615 = vmatpush2.msra.mxu0 0.0
  %616 = vmatprep.subr.mxu0 0.0
  %617 = vmatpush2.msra.mxu0 0.0
  %618 = vmatprep.mubr.f32.mxu0 0.0
  %619 = vmatmul.mubr.f32.gmra.mxu0 %v534
  %v620 = vpop.f32.mrf.mxu0
  %v621 = vadd.f32 0.0, %v620
  %v622 = vpop.f32.mrf.mxu0
  %623 = vdwg.mxu0
  %v624 = vadd.f32 %v537, %v621
  %v625 = vtanh.pop %v624
  %626 = vst [vmem:[%s536] sm:$0xff] %v625
  %s627 = scalar_lea.vmem [#allocation2], 40
  %v628 = vld [vmem:[%s627] sm:$0xff]
  %v629 = vld [vmem:[%s2] sm:$0xff]
  %v630 = vld [vmem:[%s2 + $0x8] sm:$0xff]
  %v631 = vld [vmem:[%s2 + $0x10] sm:$0xff]
  %v632 = vld [vmem:[%s2 + $0x18] sm:$0xff]
  %v633 = vld [vmem:[%s2 + $0x20] sm:$0xff]
  %v634 = vld [vmem:[%s2 + $0x28] sm:$0xff]
  %v635 = vld [vmem:[%s2 + $0x30] sm:$0xff]
  %v636 = vld [vmem:[%s2 + $0x38] sm:$0xff]
  %v637 = vld [vmem:[%s2 + $0x40] sm:$0xff]
  %v638 = vld [vmem:[%s2 + $0x48] sm:$0xff]
  %v639 = vld [vmem:[%s2 + $0x50] sm:$0xff]
  %v640 = vld [vmem:[%s2 + $0x58] sm:$0xff]
  %v641 = vld [vmem:[%s2 + $0x60] sm:$0xff]
  %v642 = vld [vmem:[%s2 + $0x68] sm:$0xff]
  %v643 = vld [vmem:[%s2 + $0x70] sm:$0xff]
  %v644 = vld [vmem:[%s2 + $0x78] sm:$0xff]
  %645 = vmatprep.subr.mxu0 0.0
  %646 = vmatpush1.msra.mxu0 %v644
  %647 = vmatprep.subr.mxu0 0.0
  %648 = vmatpush1.msra.mxu0 %v643
  %649 = vmatprep.subr.mxu0 0.0
  %650 = vmatpush1.msra.mxu0 %v642
  %651 = vmatprep.subr.mxu0 0.0
  %652 = vmatpush1.msra.mxu0 %v641
  %653 = vmatprep.subr.mxu0 0.0
  %654 = vmatpush1.msra.mxu0 %v640
  %655 = vmatprep.subr.mxu0 0.0
  %656 = vmatpush1.msra.mxu0 %v639
  %657 = vmatprep.subr.mxu0 0.0
  %658 = vmatpush1.msra.mxu0 %v638
  %659 = vmatprep.subr.mxu0 0.0
  %660 = vmatpush1.msra.mxu0 %v637
  %661 = vmatprep.subr.mxu0 0.0
  %662 = vmatpush1.msra.mxu0 %v636
  %663 = vmatprep.subr.mxu0 0.0
  %664 = vmatpush1.msra.mxu0 %v635
  %665 = vmatprep.subr.mxu0 0.0
  %666 = vmatpush1.msra.mxu0 %v634
  %667 = vmatprep.subr.mxu0 0.0
  %668 = vmatpush1.msra.mxu0 %v633
  %669 = vmatprep.subr.mxu0 0.0
  %670 = vmatpush1.msra.mxu0 %v632
  %671 = vmatprep.subr.mxu0 0.0
  %672 = vmatpush1.msra.mxu0 %v631
  %673 = vmatprep.subr.mxu0 0.0
  %674 = vmatpush1.msra.mxu0 %v630
  %675 = vmatprep.subr.mxu0 0.0
  %676 = vmatpush1.msra.mxu0 %v629
  %677 = vmatprep.subr.mxu0 0.0
  %678 = vmatpush2.msra.mxu0 0.0
  %679 = vmatprep.subr.mxu0 0.0
  %680 = vmatpush2.msra.mxu0 0.0
  %681 = vmatprep.subr.mxu0 0.0
  %682 = vmatpush2.msra.mxu0 0.0
  %683 = vmatprep.subr.mxu0 0.0
  %684 = vmatpush2.msra.mxu0 0.0
  %685 = vmatprep.subr.mxu0 0.0
  %686 = vmatpush2.msra.mxu0 0.0
  %687 = vmatprep.subr.mxu0 0.0
  %688 = vmatpush2.msra.mxu0 0.0
  %689 = vmatprep.subr.mxu0 0.0
  %690 = vmatpush2.msra.mxu0 0.0
  %691 = vmatprep.subr.mxu0 0.0
  %692 = vmatpush2.msra.mxu0 0.0
  %693 = vmatprep.subr.mxu0 0.0
  %694 = vmatpush2.msra.mxu0 0.0
  %695 = vmatprep.subr.mxu0 0.0
  %696 = vmatpush2.msra.mxu0 0.0
  %697 = vmatprep.subr.mxu0 0.0
  %698 = vmatpush2.msra.mxu0 0.0
  %699 = vmatprep.subr.mxu0 0.0
  %700 = vmatpush2.msra.mxu0 0.0
  %701 = vmatprep.subr.mxu0 0.0
  %702 = vmatpush2.msra.mxu0 0.0
  %703 = vmatprep.subr.mxu0 0.0
  %704 = vmatpush2.msra.mxu0 0.0
  %705 = vmatprep.subr.mxu0 0.0
  %706 = vmatpush2.msra.mxu0 0.0
  %707 = vmatprep.subr.mxu0 0.0
  %708 = vmatpush2.msra.mxu0 0.0
  %709 = vmatprep.mubr.f32.mxu0 0.0
  %710 = vmatmul.mubr.f32.gmra.mxu0 %v625
  %v711 = vpop.f32.mrf.mxu0
  %v712 = vadd.f32 0.0, %v711
  %v713 = vpop.f32.mrf.mxu0
  %714 = vdwg.mxu0
  %v715 = vadd.f32 %v628, %v712
  %v716 = vtanh.pop %v715
  %717 = vst [vmem:[%s627] sm:$0xff] %v716
  %s718 = scalar_lea.vmem [#allocation2], 48
  %v719 = vld [vmem:[%s718] sm:$0xff]
  %v720 = vld [vmem:[%s2] sm:$0xff]
  %v721 = vld [vmem:[%s2 + $0x8] sm:$0xff]
  %v722 = vld [vmem:[%s2 + $0x10] sm:$0xff]
  %v723 = vld [vmem:[%s2 + $0x18] sm:$0xff]
  %v724 = vld [vmem:[%s2 + $0x20] sm:$0xff]
  %v725 = vld [vmem:[%s2 + $0x28] sm:$0xff]
  %v726 = vld [vmem:[%s2 + $0x30] sm:$0xff]
  %v727 = vld [vmem:[%s2 + $0x38] sm:$0xff]
  %v728 = vld [vmem:[%s2 + $0x40] sm:$0xff]
  %v729 = vld [vmem:[%s2 + $0x48] sm:$0xff]
  %v730 = vld [vmem:[%s2 + $0x50] sm:$0xff]
  %v731 = vld [vmem:[%s2 + $0x58] sm:$0xff]
  %v732 = vld [vmem:[%s2 + $0x60] sm:$0xff]
  %v733 = vld [vmem:[%s2 + $0x68] sm:$0xff]
  %v734 = vld [vmem:[%s2 + $0x70] sm:$0xff]
  %v735 = vld [vmem:[%s2 + $0x78] sm:$0xff]
  %736 = vmatprep.subr.mxu0 0.0
  %737 = vmatpush1.msra.mxu0 %v735
  %738 = vmatprep.subr.mxu0 0.0
  %739 = vmatpush1.msra.mxu0 %v734
  %740 = vmatprep.subr.mxu0 0.0
  %741 = vmatpush1.msra.mxu0 %v733
  %742 = vmatprep.subr.mxu0 0.0
  %743 = vmatpush1.msra.mxu0 %v732
  %744 = vmatprep.subr.mxu0 0.0
  %745 = vmatpush1.msra.mxu0 %v731
  %746 = vmatprep.subr.mxu0 0.0
  %747 = vmatpush1.msra.mxu0 %v730
  %748 = vmatprep.subr.mxu0 0.0
  %749 = vmatpush1.msra.mxu0 %v729
  %750 = vmatprep.subr.mxu0 0.0
  %751 = vmatpush1.msra.mxu0 %v728
  %752 = vmatprep.subr.mxu0 0.0
  %753 = vmatpush1.msra.mxu0 %v727
  %754 = vmatprep.subr.mxu0 0.0
  %755 = vmatpush1.msra.mxu0 %v726
  %756 = vmatprep.subr.mxu0 0.0
  %757 = vmatpush1.msra.mxu0 %v725
  %758 = vmatprep.subr.mxu0 0.0
  %759 = vmatpush1.msra.mxu0 %v724
  %760 = vmatprep.subr.mxu0 0.0
  %761 = vmatpush1.msra.mxu0 %v723
  %762 = vmatprep.subr.mxu0 0.0
  %763 = vmatpush1.msra.mxu0 %v722
  %764 = vmatprep.subr.mxu0 0.0
  %765 = vmatpush1.msra.mxu0 %v721
  %766 = vmatprep.subr.mxu0 0.0
  %767 = vmatpush1.msra.mxu0 %v720
  %768 = vmatprep.subr.mxu0 0.0
  %769 = vmatpush2.msra.mxu0 0.0
  %770 = vmatprep.subr.mxu0 0.0
  %771 = vmatpush2.msra.mxu0 0.0
  %772 = vmatprep.subr.mxu0 0.0
  %773 = vmatpush2.msra.mxu0 0.0
  %774 = vmatprep.subr.mxu0 0.0
  %775 = vmatpush2.msra.mxu0 0.0
  %776 = vmatprep.subr.mxu0 0.0
  %777 = vmatpush2.msra.mxu0 0.0
  %778 = vmatprep.subr.mxu0 0.0
  %779 = vmatpush2.msra.mxu0 0.0
  %780 = vmatprep.subr.mxu0 0.0
  %781 = vmatpush2.msra.mxu0 0.0
  %782 = vmatprep.subr.mxu0 0.0
  %783 = vmatpush2.msra.mxu0 0.0
  %784 = vmatprep.subr.mxu0 0.0
  %785 = vmatpush2.msra.mxu0 0.0
  %786 = vmatprep.subr.mxu0 0.0
  %787 = vmatpush2.msra.mxu0 0.0
  %788 = vmatprep.subr.mxu0 0.0
  %789 = vmatpush2.msra.mxu0 0.0
  %790 = vmatprep.subr.mxu0 0.0
  %791 = vmatpush2.msra.mxu0 0.0
  %792 = vmatprep.subr.mxu0 0.0
  %793 = vmatpush2.msra.mxu0 0.0
  %794 = vmatprep.subr.mxu0 0.0
  %795 = vmatpush2.msra.mxu0 0.0
  %796 = vmatprep.subr.mxu0 0.0
  %797 = vmatpush2.msra.mxu0 0.0
  %798 = vmatprep.subr.mxu0 0.0
  %799 = vmatpush2.msra.mxu0 0.0
  %800 = vmatprep.mubr.f32.mxu0 0.0
  %801 = vmatmul.mubr.f32.gmra.mxu0 %v716
  %v802 = vpop.f32.mrf.mxu0
  %v803 = vadd.f32 0.0, %v802
  %v804 = vpop.f32.mrf.mxu0
  %805 = vdwg.mxu0
  %v806 = vadd.f32 %v719, %v803
  %v807 = vtanh.pop %v806
  %808 = vst [vmem:[%s718] sm:$0xff] %v807
  %s809 = scalar_lea.vmem [#allocation2], 56
  %v810 = vld [vmem:[%s809] sm:$0xff]
  %v811 = vld [vmem:[%s2] sm:$0xff]
  %v812 = vld [vmem:[%s2 + $0x8] sm:$0xff]
  %v813 = vld [vmem:[%s2 + $0x10] sm:$0xff]
  %v814 = vld [vmem:[%s2 + $0x18] sm:$0xff]
  %v815 = vld [vmem:[%s2 + $0x20] sm:$0xff]
  %v816 = vld [vmem:[%s2 + $0x28] sm:$0xff]
  %v817 = vld [vmem:[%s2 + $0x30] sm:$0xff]
  %v818 = vld [vmem:[%s2 + $0x38] sm:$0xff]
  %v819 = vld [vmem:[%s2 + $0x40] sm:$0xff]
  %v820 = vld [vmem:[%s2 + $0x48] sm:$0xff]
  %v821 = vld [vmem:[%s2 + $0x50] sm:$0xff]
  %v822 = vld [vmem:[%s2 + $0x58] sm:$0xff]
  %v823 = vld [vmem:[%s2 + $0x60] sm:$0xff]
  %v824 = vld [vmem:[%s2 + $0x68] sm:$0xff]
  %v825 = vld [vmem:[%s2 + $0x70] sm:$0xff]
  %v826 = vld [vmem:[%s2 + $0x78] sm:$0xff]
  %827 = vmatprep.subr.mxu0 0.0
  %828 = vmatpush1.msra.mxu0 %v826
  %829 = vmatprep.subr.mxu0 0.0
  %830 = vmatpush1.msra.mxu0 %v825
  %831 = vmatprep.subr.mxu0 0.0
  %832 = vmatpush1.msra.mxu0 %v824
  %833 = vmatprep.subr.mxu0 0.0
  %834 = vmatpush1.msra.mxu0 %v823
  %835 = vmatprep.subr.mxu0 0.0
  %836 = vmatpush1.msra.mxu0 %v822
  %837 = vmatprep.subr.mxu0 0.0
  %838 = vmatpush1.msra.mxu0 %v821
  %839 = vmatprep.subr.mxu0 0.0
  %840 = vmatpush1.msra.mxu0 %v820
  %841 = vmatprep.subr.mxu0 0.0
  %842 = vmatpush1.msra.mxu0 %v819
  %843 = vmatprep.subr.mxu0 0.0
  %844 = vmatpush1.msra.mxu0 %v818
  %845 = vmatprep.subr.mxu0 0.0
  %846 = vmatpush1.msra.mxu0 %v817
  %847 = vmatprep.subr.mxu0 0.0
  %848 = vmatpush1.msra.mxu0 %v816
  %849 = vmatprep.subr.mxu0 0.0
  %850 = vmatpush1.msra.mxu0 %v815
  %851 = vmatprep.subr.mxu0 0.0
  %852 = vmatpush1.msra.mxu0 %v814
  %853 = vmatprep.subr.mxu0 0.0
  %854 = vmatpush1.msra.mxu0 %v813
  %855 = vmatprep.subr.mxu0 0.0
  %856 = vmatpush1.msra.mxu0 %v812
  %857 = vmatprep.subr.mxu0 0.0
  %858 = vmatpush1.msra.mxu0 %v811
  %859 = vmatprep.subr.mxu0 0.0
  %860 = vmatpush2.msra.mxu0 0.0
  %861 = vmatprep.subr.mxu0 0.0
  %862 = vmatpush2.msra.mxu0 0.0
  %863 = vmatprep.subr.mxu0 0.0
  %864 = vmatpush2.msra.mxu0 0.0
  %865 = vmatprep.subr.mxu0 0.0
  %866 = vmatpush2.msra.mxu0 0.0
  %867 = vmatprep.subr.mxu0 0.0
  %868 = vmatpush2.msra.mxu0 0.0
  %869 = vmatprep.subr.mxu0 0.0
  %870 = vmatpush2.msra.mxu0 0.0
  %871 = vmatprep.subr.mxu0 0.0
  %872 = vmatpush2.msra.mxu0 0.0
  %873 = vmatprep.subr.mxu0 0.0
  %874 = vmatpush2.msra.mxu0 0.0
  %875 = vmatprep.subr.mxu0 0.0
  %876 = vmatpush2.msra.mxu0 0.0
  %877 = vmatprep.subr.mxu0 0.0
  %878 = vmatpush2.msra.mxu0 0.0
  %879 = vmatprep.subr.mxu0 0.0
  %880 = vmatpush2.msra.mxu0 0.0
  %881 = vmatprep.subr.mxu0 0.0
  %882 = vmatpush2.msra.mxu0 0.0
  %883 = vmatprep.subr.mxu0 0.0
  %884 = vmatpush2.msra.mxu0 0.0
  %885 = vmatprep.subr.mxu0 0.0
  %886 = vmatpush2.msra.mxu0 0.0
  %887 = vmatprep.subr.mxu0 0.0
  %888 = vmatpush2.msra.mxu0 0.0
  %889 = vmatprep.subr.mxu0 0.0
  %890 = vmatpush2.msra.mxu0 0.0
  %891 = vmatprep.mubr.f32.mxu0 0.0
  %892 = vmatmul.mubr.f32.gmra.mxu0 %v807
  %v893 = vpop.f32.mrf.mxu0
  %v894 = vadd.f32 0.0, %v893
  %v895 = vpop.f32.mrf.mxu0
  %896 = vdwg.mxu0
  %v897 = vadd.f32 %v810, %v894
  %v898 = vtanh.pop %v897
  %899 = vst [vmem:[%s809] sm:$0xff] %v898
  %900 = vst [vmem:[#allocation3] sm:$0xff] %v898
  %v901 = vld [vmem:[#allocation2] sm:$0xff]
  %v902 = vld [vmem:[#allocation2 + $0x8] sm:$0xff]
  %v903 = vld [vmem:[#allocation2 + $0x10] sm:$0xff]
  %v904 = vld [vmem:[#allocation2 + $0x18] sm:$0xff]
  %v905 = vld [vmem:[#allocation2 + $0x20] sm:$0xff]
  %v906 = vld [vmem:[#allocation2 + $0x28] sm:$0xff]
  %v907 = vld [vmem:[#allocation2 + $0x30] sm:$0xff]
  %v908 = vld [vmem:[#allocation2 + $0x38] sm:$0xff]
  %v909 = vld [vmem:[%s4] sm:$0xff]
  %v910 = vld [vmem:[%s4 + $0x8] sm:$0xff]
  %v911 = vld [vmem:[%s4 + $0x10] sm:$0xff]
  %v912 = vld [vmem:[%s4 + $0x18] sm:$0xff]
  %v913 = vld [vmem:[%s4 + $0x20] sm:$0xff]
  %v914 = vld [vmem:[%s4 + $0x28] sm:$0xff]
  %v915 = vld [vmem:[%s4 + $0x30] sm:$0xff]
  %v916 = vld [vmem:[%s4 + $0x38] sm:$0xff]
  %v917 = vld [vmem:[%s4 + $0x40] sm:$0xff]
  %v918 = vld [vmem:[%s4 + $0x48] sm:$0xff]
  %v919 = vld [vmem:[%s4 + $0x50] sm:$0xff]
  %v920 = vld [vmem:[%s4 + $0x58] sm:$0xff]
  %v921 = vld [vmem:[%s4 + $0x60] sm:$0xff]
  %v922 = vld [vmem:[%s4 + $0x68] sm:$0xff]
  %v923 = vld [vmem:[%s4 + $0x70] sm:$0xff]
  %v924 = vld [vmem:[%s4 + $0x78] sm:$0xff]
  %v925 = vld [vmem:[%s5] sm:$0x1]
  %v927 = vlaneseq
  %v928 = vshrl.u32 %v927, 7
  %v929 = vsub.s32 0, %v928
  %v930 = vrot.slane %v925, %v929
  %932 = vmatprep.subr.mxu0 0.0
  %933 = vmatpush1.msra.mxu0 %v924
  %934 = vmatprep.subr.mxu0 0.0
  %935 = vmatpush1.msra.mxu0 %v923
  %936 = vmatprep.subr.mxu0 0.0
  %937 = vmatpush1.msra.mxu0 %v922
  %938 = vmatprep.subr.mxu0 0.0
  %939 = vmatpush1.msra.mxu0 %v921
  %940 = vmatprep.subr.mxu0 0.0
  %941 = vmatpush1.msra.mxu0 %v920
  %942 = vmatprep.subr.mxu0 0.0
  %943 = vmatpush1.msra.mxu0 %v919
  %944 = vmatprep.subr.mxu0 0.0
  %945 = vmatpush1.msra.mxu0 %v918
  %946 = vmatprep.subr.mxu0 0.0
  %947 = vmatpush1.msra.mxu0 %v917
  %948 = vmatprep.subr.mxu0 0.0
  %949 = vmatpush1.msra.mxu0 %v916
  %950 = vmatprep.subr.mxu0 0.0
  %951 = vmatpush1.msra.mxu0 %v915
  %952 = vmatprep.subr.mxu0 0.0
  %953 = vmatpush1.msra.mxu0 %v914
  %954 = vmatprep.subr.mxu0 0.0
  %955 = vmatpush1.msra.mxu0 %v913
  %956 = vmatprep.subr.mxu0 0.0
  %957 = vmatpush1.msra.mxu0 %v912
  %958 = vmatprep.subr.mxu0 0.0
  %959 = vmatpush1.msra.mxu0 %v911
  %960 = vmatprep.subr.mxu0 0.0
  %961 = vmatpush1.msra.mxu0 %v910
  %962 = vmatprep.subr.mxu0 0.0
  %963 = vmatpush1.msra.mxu0 %v909
  %964 = vmatprep.subr.mxu0 0.0
  %965 = vmatpush2.msra.mxu0 0.0
  %966 = vmatprep.subr.mxu0 0.0
  %967 = vmatpush2.msra.mxu0 0.0
  %968 = vmatprep.subr.mxu0 0.0
  %969 = vmatpush2.msra.mxu0 0.0
  %970 = vmatprep.subr.mxu0 0.0
  %971 = vmatpush2.msra.mxu0 0.0
  %972 = vmatprep.subr.mxu0 0.0
  %973 = vmatpush2.msra.mxu0 0.0
  %974 = vmatprep.subr.mxu0 0.0
  %975 = vmatpush2.msra.mxu0 0.0
  %976 = vmatprep.subr.mxu0 0.0
  %977 = vmatpush2.msra.mxu0 0.0
  %978 = vmatprep.subr.mxu0 0.0
  %979 = vmatpush2.msra.mxu0 0.0
  %980 = vmatprep.subr.mxu0 0.0
  %981 = vmatpush2.msra.mxu0 0.0
  %982 = vmatprep.subr.mxu0 0.0
  %983 = vmatpush2.msra.mxu0 0.0
  %984 = vmatprep.subr.mxu0 0.0
  %985 = vmatpush2.msra.mxu0 0.0
  %986 = vmatprep.subr.mxu0 0.0
  %987 = vmatpush2.msra.mxu0 0.0
  %988 = vmatprep.subr.mxu0 0.0
  %989 = vmatpush2.msra.mxu0 0.0
  %990 = vmatprep.subr.mxu0 0.0
  %991 = vmatpush2.msra.mxu0 0.0
  %992 = vmatprep.subr.mxu0 0.0
  %993 = vmatpush2.msra.mxu0 0.0
  %994 = vmatprep.subr.mxu0 0.0
  %995 = vmatpush2.msra.mxu0 0.0
  %996 = vmatprep.mubr.f32.mxu0 0.0
  %997 = vmatmul.mubr.f32.gmra.mxu0 %v901
  %v998 = vpop.f32.mrf.mxu0
  %v999 = vadd.f32 %v930, %v998
  %v1000 = vpop.f32.mrf.mxu0
  %1001 = vmatprep.mubr.f32.mxu0 0.0
  %1002 = vmatmul.mubr.f32.gmra.mxu0 %v902
  %v1003 = vpop.f32.mrf.mxu0
  %v1004 = vadd.f32 %v930, %v1003
  %v1005 = vpop.f32.mrf.mxu0
  %1006 = vmatprep.mubr.f32.mxu0 0.0
  %1007 = vmatmul.mubr.f32.gmra.mxu0 %v903
  %v1008 = vpop.f32.mrf.mxu0
  %v1009 = vadd.f32 %v930, %v1008
  %v1010 = vpop.f32.mrf.mxu0
  %1011 = vmatprep.mubr.f32.mxu0 0.0
  %1012 = vmatmul.mubr.f32.gmra.mxu0 %v904
  %v1013 = vpop.f32.mrf.mxu0
  %v1014 = vadd.f32 %v930, %v1013
  %v1015 = vpop.f32.mrf.mxu0
  %1016 = vmatprep.mubr.f32.mxu0 0.0
  %1017 = vmatmul.mubr.f32.gmra.mxu0 %v905
  %v1018 = vpop.f32.mrf.mxu0
  %v1019 = vadd.f32 %v930, %v1018
  %v1020 = vpop.f32.mrf.mxu0
  %1021 = vmatprep.mubr.f32.mxu0 0.0
  %1022 = vmatmul.mubr.f32.gmra.mxu0 %v906
  %v1023 = vpop.f32.mrf.mxu0
  %v1024 = vadd.f32 %v930, %v1023
  %v1025 = vpop.f32.mrf.mxu0
  %1026 = vmatprep.mubr.f32.mxu0 0.0
  %1027 = vmatmul.mubr.f32.gmra.mxu0 %v907
  %v1028 = vpop.f32.mrf.mxu0
  %v1029 = vadd.f32 %v930, %v1028
  %v1030 = vpop.f32.mrf.mxu0
  %1031 = vmatprep.mubr.f32.mxu0 0.0
  %1032 = vmatmul.mubr.f32.gmra.mxu0 %v908
  %v1033 = vpop.f32.mrf.mxu0
  %v1034 = vadd.f32 %v930, %v1033
  %v1035 = vpop.f32.mrf.mxu0
  %1036 = vdwg.mxu0
  %1037 = vst [vmem:[%s6] sm:$0xff] %v999
  %1038 = vst [vmem:[%s6 + $0x8] sm:$0xff] %v1004
  %1039 = vst [vmem:[%s6 + $0x10] sm:$0xff] %v1009
  %1040 = vst [vmem:[%s6 + $0x18] sm:$0xff] %v1014
  %1041 = vst [vmem:[%s6 + $0x20] sm:$0xff] %v1019
  %1042 = vst [vmem:[%s6 + $0x28] sm:$0xff] %v1024
  %1043 = vst [vmem:[%s6 + $0x30] sm:$0xff] %v1029
  %1044 = vst [vmem:[%s6 + $0x38] sm:$0xff] %v1034
  // Predicated region
  $region30: #{simple_rnn_model.1} parent=0 // pred_check
    _
  $region31: #{simple_rnn_model.1} parent=0 // pred_check_branch
    %1046 = sbr.rel (0) target = $region33
  $region32: #{simple_rnn_model.1} parent=0 // pred_region
    _
  $region33: #{simple_rnn_model.1} parent=0 // pred_fallthru
    _
  // Predicated region
  $region34: #{simple_rnn_model.1} parent=0 // pred_check
    _
  $region35: #{simple_rnn_model.1} parent=0 // pred_check_branch
    %1048 = sbr.rel (0) target = $region37
  $region36: #{simple_rnn_model.1} parent=0 // pred_region
    _
  $region37: #{simple_rnn_model.1} parent=0 // pred_fallthru
    _

// kernel: simple_rnn_model.1
$region0: #{simple_rnn_model.1}
  #allocation0 [shape = 'u32[]', space=smem, size = 0x4, offset = 0x4, fixed_abs, tag = 'smem constant byte address 0x4 - core index']
  #allocation1 [shape = 'u32[144,128]{1,0:T(1,128)}', space=vmem, size = 0x12000, scoped, tag = 'internal scratch']
  #allocation2 [shape = 'f32[8,8,128]{2,1,0:T(8,128)}', space=vmem, size = 0x8000, scoped, tag = 'scratch operand']
  #allocation3 [shape = 'f32[8,128]{1,0:T(8,128)}', space=vmem, size = 0x1000, scoped, tag = 'scratch operand']
  %s0 = inlined_call_operand.vmem [shape: f32[8,8,128], index: 0, kind: input, shape index: {}]
  %s1 = inlined_call_operand.vmem [shape: f32[128,128], index: 1, kind: input, shape index: {}]
  %s2 = inlined_call_operand.vmem [shape: f32[128,128], index: 2, kind: input, shape index: {}]
  %s3 = inlined_call_operand.vmem [shape: f32[1,128], index: 3, kind: input, shape index: {}]
  %s4 = inlined_call_operand.vmem [shape: f32[128,128], index: 4, kind: input, shape index: {}]
  %s5 = inlined_call_operand.vmem [shape: f32[1,128], index: 5, kind: input, shape index: {}]
  %s6 = inlined_call_operand.vmem [shape: f32[8,8,128], index: 6, kind: output, shape index: {}]
  %s7 = sld [smem:[#allocation0]]
  $region38: #{simple_rnn_model.1} parent=0
    _
  %s9 = ssub.s32 1, %s7
  %s10 = scalar_select 0, %s9, %s7
  // Predicated region
  $region2: #{simple_rnn_model.1} parent=0 // pred_check
    _
  $region3: #{simple_rnn_model.1} parent=0 // pred_check_branch
    %12 = sbr.rel (0) target = $region5
  $region4: #{simple_rnn_model.1} parent=0 // pred_region
    _
  $region5: #{simple_rnn_model.1} parent=0 // pred_fallthru
    _
  // Predicated region
  $region6: #{simple_rnn_model.1} parent=0 // pred_check
    _
  $region7: #{simple_rnn_model.1} parent=0 // pred_check_branch
    %14 = sbr.rel (0) target = $region9
  $region8: #{simple_rnn_model.1} parent=0 // pred_region
    _
  $region9: #{simple_rnn_model.1} parent=0 // pred_fallthru
    _
  // Predicated region
  $region10: #{simple_rnn_model.1} parent=0 // pred_check
    _
  $region11: #{simple_rnn_model.1} parent=0 // pred_check_branch
    %16 = sbr.rel (0) target = $region13
  $region12: #{simple_rnn_model.1} parent=0 // pred_region
    _
  $region13: #{simple_rnn_model.1} parent=0 // pred_fallthru
    _
  // Predicated region
  $region14: #{simple_rnn_model.1} parent=0 // pred_check
    _
  $region15: #{simple_rnn_model.1} parent=0 // pred_check_branch
    %18 = sbr.rel (0) target = $region17
  $region16: #{simple_rnn_model.1} parent=0 // pred_region
    _
  $region17: #{simple_rnn_model.1} parent=0 // pred_fallthru
    _
  // Predicated region
  $region18: #{simple_rnn_model.1} parent=0 // pred_check
    _
  $region19: #{simple_rnn_model.1} parent=0 // pred_check_branch
    %20 = sbr.rel (0) target = $region21
  $region20: #{simple_rnn_model.1} parent=0 // pred_region
    _
  $region21: #{simple_rnn_model.1} parent=0 // pred_fallthru
    _
  // Predicated region
  $region22: #{simple_rnn_model.1} parent=0 // pred_check
    _
  $region23: #{simple_rnn_model.1} parent=0 // pred_check_branch
    %22 = sbr.rel (0) target = $region25
  $region24: #{simple_rnn_model.1} parent=0 // pred_region
    _
  $region25: #{simple_rnn_model.1} parent=0 // pred_fallthru
    _
  %p23 = scmp.eq.s32.totalorder 0, 0
  // Predicated region
  $region26: #{simple_rnn_model.1} parent=0 // pred_check
    %p24 = pneg %p23
  $region27: #{simple_rnn_model.1} parent=0 // pred_check_branch
    %26 = sbr.rel (%p24) target = $region29
  $region28: #{simple_rnn_model.1} parent=0 // pred_region
    %27 = vst [vmem:[#allocation3] sm:$0xff] 0.0
  $region29: #{simple_rnn_model.1} parent=0 // pred_fallthru
    _
  %v28 = vld [vmem:[%s0] sm:$0xff]
  %v29 = vld [vmem:[%s0 + $0x8] sm:$0xff]
  %v30 = vld [vmem:[%s0 + $0x10] sm:$0xff]
  %v31 = vld [vmem:[%s0 + $0x18] sm:$0xff]
  %v32 = vld [vmem:[%s0 + $0x20] sm:$0xff]
  %v33 = vld [vmem:[%s0 + $0x28] sm:$0xff]
  %v34 = vld [vmem:[%s0 + $0x30] sm:$0xff]
  %v35 = vld [vmem:[%s0 + $0x38] sm:$0xff]
  %v36 = vld [vmem:[%s1] sm:$0xff]
  %v37 = vld [vmem:[%s1 + $0x8] sm:$0xff]
  %v38 = vld [vmem:[%s1 + $0x10] sm:$0xff]
  %v39 = vld [vmem:[%s1 + $0x18] sm:$0xff]
  %v40 = vld [vmem:[%s1 + $0x20] sm:$0xff]
  %v41 = vld [vmem:[%s1 + $0x28] sm:$0xff]
  %v42 = vld [vmem:[%s1 + $0x30] sm:$0xff]
  %v43 = vld [vmem:[%s1 + $0x38] sm:$0xff]
  %v44 = vld [vmem:[%s1 + $0x40] sm:$0xff]
  %v45 = vld [vmem:[%s1 + $0x48] sm:$0xff]
  %v46 = vld [vmem:[%s1 + $0x50] sm:$0xff]
  %v47 = vld [vmem:[%s1 + $0x58] sm:$0xff]
  %v48 = vld [vmem:[%s1 + $0x60] sm:$0xff]
  %v49 = vld [vmem:[%s1 + $0x68] sm:$0xff]
  %v50 = vld [vmem:[%s1 + $0x70] sm:$0xff]
  %v51 = vld [vmem:[%s1 + $0x78] sm:$0xff]
  %v52 = vld [vmem:[%s3] sm:$0x1]
  %v54 = vlaneseq
  %v55 = vshrl.u32 %v54, 7
  %v56 = vsub.s32 0, %v55
  %v57 = vrot.slane %v52, %v56
  %59 = vmatprep.subr.mxu0 0.0
  %60 = vmatpush1.msra.mxu0 %v51
  %61 = vmatprep.subr.mxu0 0.0
  %62 = vmatpush1.msra.mxu0 %v50
  %63 = vmatprep.subr.mxu0 0.0
  %64 = vmatpush1.msra.mxu0 %v49
  %65 = vmatprep.subr.mxu0 0.0
  %66 = vmatpush1.msra.mxu0 %v48
  %67 = vmatprep.subr.mxu0 0.0
  %68 = vmatpush1.msra.mxu0 %v47
  %69 = vmatprep.subr.mxu0 0.0
  %70 = vmatpush1.msra.mxu0 %v46
  %71 = vmatprep.subr.mxu0 0.0
  %72 = vmatpush1.msra.mxu0 %v45
  %73 = vmatprep.subr.mxu0 0.0
  %74 = vmatpush1.msra.mxu0 %v44
  %75 = vmatprep.subr.mxu0 0.0
  %76 = vmatpush1.msra.mxu0 %v43
  %77 = vmatprep.subr.mxu0 0.0
  %78 = vmatpush1.msra.mxu0 %v42
  %79 = vmatprep.subr.mxu0 0.0
  %80 = vmatpush1.msra.mxu0 %v41
  %81 = vmatprep.subr.mxu0 0.0
  %82 = vmatpush1.msra.mxu0 %v40
  %83 = vmatprep.subr.mxu0 0.0
  %84 = vmatpush1.msra.mxu0 %v39
  %85 = vmatprep.subr.mxu0 0.0
  %86 = vmatpush1.msra.mxu0 %v38
  %87 = vmatprep.subr.mxu0 0.0
  %88 = vmatpush1.msra.mxu0 %v37
  %89 = vmatprep.subr.mxu0 0.0
  %90 = vmatpush1.msra.mxu0 %v36
  %91 = vmatprep.subr.mxu0 0.0
  %92 = vmatpush2.msra.mxu0 0.0
  %93 = vmatprep.subr.mxu0 0.0
  %94 = vmatpush2.msra.mxu0 0.0
  %95 = vmatprep.subr.mxu0 0.0
  %96 = vmatpush2.msra.mxu0 0.0
  %97 = vmatprep.subr.mxu0 0.0
  %98 = vmatpush2.msra.mxu0 0.0
  %99 = vmatprep.subr.mxu0 0.0
  %100 = vmatpush2.msra.mxu0 0.0
  %101 = vmatprep.subr.mxu0 0.0
  %102 = vmatpush2.msra.mxu0 0.0
  %103 = vmatprep.subr.mxu0 0.0
  %104 = vmatpush2.msra.mxu0 0.0
  %105 = vmatprep.subr.mxu0 0.0
  %106 = vmatpush2.msra.mxu0 0.0
  %107 = vmatprep.subr.mxu0 0.0
  %108 = vmatpush2.msra.mxu0 0.0
  %109 = vmatprep.subr.mxu0 0.0
  %110 = vmatpush2.msra.mxu0 0.0
  %111 = vmatprep.subr.mxu0 0.0
  %112 = vmatpush2.msra.mxu0 0.0
  %113 = vmatprep.subr.mxu0 0.0
  %114 = vmatpush2.msra.mxu0 0.0
  %115 = vmatprep.subr.mxu0 0.0
  %116 = vmatpush2.msra.mxu0 0.0
  %117 = vmatprep.subr.mxu0 0.0
  %118 = vmatpush2.msra.mxu0 0.0
  %119 = vmatprep.subr.mxu0 0.0
  %120 = vmatpush2.msra.mxu0 0.0
  %121 = vmatprep.subr.mxu0 0.0
  %122 = vmatpush2.msra.mxu0 0.0
  %123 = vmatprep.mubr.f32.mxu0 0.0
  %124 = vmatmul.mubr.f32.gmra.mxu0 %v28
  %v125 = vpop.f32.mrf.mxu0
  %v126 = vadd.f32 %v57, %v125
  %v127 = vpop.f32.mrf.mxu0
  %128 = vmatprep.mubr.f32.mxu0 0.0
  %129 = vmatmul.mubr.f32.gmra.mxu0 %v29
  %v130 = vpop.f32.mrf.mxu0
  %v131 = vadd.f32 %v57, %v130
  %v132 = vpop.f32.mrf.mxu0
  %133 = vmatprep.mubr.f32.mxu0 0.0
  %134 = vmatmul.mubr.f32.gmra.mxu0 %v30
  %v135 = vpop.f32.mrf.mxu0
  %v136 = vadd.f32 %v57, %v135
  %v137 = vpop.f32.mrf.mxu0
  %138 = vmatprep.mubr.f32.mxu0 0.0
  %139 = vmatmul.mubr.f32.gmra.mxu0 %v31
  %v140 = vpop.f32.mrf.mxu0
  %v141 = vadd.f32 %v57, %v140
  %v142 = vpop.f32.mrf.mxu0
  %143 = vmatprep.mubr.f32.mxu0 0.0
  %144 = vmatmul.mubr.f32.gmra.mxu0 %v32
  %v145 = vpop.f32.mrf.mxu0
  %v146 = vadd.f32 %v57, %v145
  %v147 = vpop.f32.mrf.mxu0
  %148 = vmatprep.mubr.f32.mxu0 0.0
  %149 = vmatmul.mubr.f32.gmra.mxu0 %v33
  %v150 = vpop.f32.mrf.mxu0
  %v151 = vadd.f32 %v57, %v150
  %v152 = vpop.f32.mrf.mxu0
  %153 = vmatprep.mubr.f32.mxu0 0.0
  %154 = vmatmul.mubr.f32.gmra.mxu0 %v34
  %v155 = vpop.f32.mrf.mxu0
  %v156 = vadd.f32 %v57, %v155
  %v157 = vpop.f32.mrf.mxu0
  %158 = vmatprep.mubr.f32.mxu0 0.0
  %159 = vmatmul.mubr.f32.gmra.mxu0 %v35
  %v160 = vpop.f32.mrf.mxu0
  %v161 = vadd.f32 %v57, %v160
  %v162 = vpop.f32.mrf.mxu0
  %163 = vdwg.mxu0
  %164 = vst [vmem:[#allocation2] sm:$0xff] %v126
  %165 = vst [vmem:[#allocation2 + $0x8] sm:$0xff] %v131
  %166 = vst [vmem:[#allocation2 + $0x10] sm:$0xff] %v136
  %167 = vst [vmem:[#allocation2 + $0x18] sm:$0xff] %v141
  %168 = vst [vmem:[#allocation2 + $0x20] sm:$0xff] %v146
  %169 = vst [vmem:[#allocation2 + $0x28] sm:$0xff] %v151
  %170 = vst [vmem:[#allocation2 + $0x30] sm:$0xff] %v156
  %171 = vst [vmem:[#allocation2 + $0x38] sm:$0xff] %v161
  %v172 = vld [vmem:[#allocation3] sm:$0xff]
  %v173 = vld [vmem:[#allocation2] sm:$0xff]
  %v174 = vld [vmem:[%s2] sm:$0xff]
  %v175 = vld [vmem:[%s2 + $0x8] sm:$0xff]
  %v176 = vld [vmem:[%s2 + $0x10] sm:$0xff]
  %v177 = vld [vmem:[%s2 + $0x18] sm:$0xff]
  %v178 = vld [vmem:[%s2 + $0x20] sm:$0xff]
  %v179 = vld [vmem:[%s2 + $0x28] sm:$0xff]
  %v180 = vld [vmem:[%s2 + $0x30] sm:$0xff]
  %v181 = vld [vmem:[%s2 + $0x38] sm:$0xff]
  %v182 = vld [vmem:[%s2 + $0x40] sm:$0xff]
  %v183 = vld [vmem:[%s2 + $0x48] sm:$0xff]
  %v184 = vld [vmem:[%s2 + $0x50] sm:$0xff]
  %v185 = vld [vmem:[%s2 + $0x58] sm:$0xff]
  %v186 = vld [vmem:[%s2 + $0x60] sm:$0xff]
  %v187 = vld [vmem:[%s2 + $0x68] sm:$0xff]
  %v188 = vld [vmem:[%s2 + $0x70] sm:$0xff]
  %v189 = vld [vmem:[%s2 + $0x78] sm:$0xff]
  %190 = vmatprep.subr.mxu0 0.0
  %191 = vmatpush1.msra.mxu0 %v189
  %192 = vmatprep.subr.mxu0 0.0
  %193 = vmatpush1.msra.mxu0 %v188
  %194 = vmatprep.subr.mxu0 0.0
  %195 = vmatpush1.msra.mxu0 %v187
  %196 = vmatprep.subr.mxu0 0.0
  %197 = vmatpush1.msra.mxu0 %v186
  %198 = vmatprep.subr.mxu0 0.0
  %199 = vmatpush1.msra.mxu0 %v185
  %200 = vmatprep.subr.mxu0 0.0
  %201 = vmatpush1.msra.mxu0 %v184
  %202 = vmatprep.subr.mxu0 0.0
  %203 = vmatpush1.msra.mxu0 %v183
  %204 = vmatprep.subr.mxu0 0.0
  %205 = vmatpush1.msra.mxu0 %v182
  %206 = vmatprep.subr.mxu0 0.0
  %207 = vmatpush1.msra.mxu0 %v181
  %208 = vmatprep.subr.mxu0 0.0
  %209 = vmatpush1.msra.mxu0 %v180
  %210 = vmatprep.subr.mxu0 0.0
  %211 = vmatpush1.msra.mxu0 %v179
  %212 = vmatprep.subr.mxu0 0.0
  %213 = vmatpush1.msra.mxu0 %v178
  %214 = vmatprep.subr.mxu0 0.0
  %215 = vmatpush1.msra.mxu0 %v177
  %216 = vmatprep.subr.mxu0 0.0
  %217 = vmatpush1.msra.mxu0 %v176
  %218 = vmatprep.subr.mxu0 0.0
  %219 = vmatpush1.msra.mxu0 %v175
  %220 = vmatprep.subr.mxu0 0.0
  %221 = vmatpush1.msra.mxu0 %v174
  %222 = vmatprep.subr.mxu0 0.0
  %223 = vmatpush2.msra.mxu0 0.0
  %224 = vmatprep.subr.mxu0 0.0
  %225 = vmatpush2.msra.mxu0 0.0
  %226 = vmatprep.subr.mxu0 0.0
  %227 = vmatpush2.msra.mxu0 0.0
  %228 = vmatprep.subr.mxu0 0.0
  %229 = vmatpush2.msra.mxu0 0.0
  %230 = vmatprep.subr.mxu0 0.0
  %231 = vmatpush2.msra.mxu0 0.0
  %232 = vmatprep.subr.mxu0 0.0
  %233 = vmatpush2.msra.mxu0 0.0
  %234 = vmatprep.subr.mxu0 0.0
  %235 = vmatpush2.msra.mxu0 0.0
  %236 = vmatprep.subr.mxu0 0.0
  %237 = vmatpush2.msra.mxu0 0.0
  %238 = vmatprep.subr.mxu0 0.0
  %239 = vmatpush2.msra.mxu0 0.0
  %240 = vmatprep.subr.mxu0 0.0
  %241 = vmatpush2.msra.mxu0 0.0
  %242 = vmatprep.subr.mxu0 0.0
  %243 = vmatpush2.msra.mxu0 0.0
  %244 = vmatprep.subr.mxu0 0.0
  %245 = vmatpush2.msra.mxu0 0.0
  %246 = vmatprep.subr.mxu0 0.0
  %247 = vmatpush2.msra.mxu0 0.0
  %248 = vmatprep.subr.mxu0 0.0
  %249 = vmatpush2.msra.mxu0 0.0
  %250 = vmatprep.subr.mxu0 0.0
  %251 = vmatpush2.msra.mxu0 0.0
  %252 = vmatprep.subr.mxu0 0.0
  %253 = vmatpush2.msra.mxu0 0.0
  %254 = vmatprep.mubr.f32.mxu0 0.0
  %255 = vmatmul.mubr.f32.gmra.mxu0 %v172
  %v256 = vpop.f32.mrf.mxu0
  %v257 = vadd.f32 0.0, %v256
  %v258 = vpop.f32.mrf.mxu0
  %259 = vdwg.mxu0
  %v260 = vadd.f32 %v173, %v257
  %v261 = vtanh.pop %v260
  %262 = vst [vmem:[#allocation2] sm:$0xff] %v261
  %s263 = scalar_lea.vmem [#allocation2], 8
  %v264 = vld [vmem:[%s263] sm:$0xff]
  %v265 = vld [vmem:[%s2] sm:$0xff]
  %v266 = vld [vmem:[%s2 + $0x8] sm:$0xff]
  %v267 = vld [vmem:[%s2 + $0x10] sm:$0xff]
  %v268 = vld [vmem:[%s2 + $0x18] sm:$0xff]
  %v269 = vld [vmem:[%s2 + $0x20] sm:$0xff]
  %v270 = vld [vmem:[%s2 + $0x28] sm:$0xff]
  %v271 = vld [vmem:[%s2 + $0x30] sm:$0xff]
  %v272 = vld [vmem:[%s2 + $0x38] sm:$0xff]
  %v273 = vld [vmem:[%s2 + $0x40] sm:$0xff]
  %v274 = vld [vmem:[%s2 + $0x48] sm:$0xff]
  %v275 = vld [vmem:[%s2 + $0x50] sm:$0xff]
  %v276 = vld [vmem:[%s2 + $0x58] sm:$0xff]
  %v277 = vld [vmem:[%s2 + $0x60] sm:$0xff]
  %v278 = vld [vmem:[%s2 + $0x68] sm:$0xff]
  %v279 = vld [vmem:[%s2 + $0x70] sm:$0xff]
  %v280 = vld [vmem:[%s2 + $0x78] sm:$0xff]
  %281 = vmatprep.subr.mxu0 0.0
  %282 = vmatpush1.msra.mxu0 %v280
  %283 = vmatprep.subr.mxu0 0.0
  %284 = vmatpush1.msra.mxu0 %v279
  %285 = vmatprep.subr.mxu0 0.0
  %286 = vmatpush1.msra.mxu0 %v278
  %287 = vmatprep.subr.mxu0 0.0
  %288 = vmatpush1.msra.mxu0 %v277
  %289 = vmatprep.subr.mxu0 0.0
  %290 = vmatpush1.msra.mxu0 %v276
  %291 = vmatprep.subr.mxu0 0.0
  %292 = vmatpush1.msra.mxu0 %v275
  %293 = vmatprep.subr.mxu0 0.0
  %294 = vmatpush1.msra.mxu0 %v274
  %295 = vmatprep.subr.mxu0 0.0
  %296 = vmatpush1.msra.mxu0 %v273
  %297 = vmatprep.subr.mxu0 0.0
  %298 = vmatpush1.msra.mxu0 %v272
  %299 = vmatprep.subr.mxu0 0.0
  %300 = vmatpush1.msra.mxu0 %v271
  %301 = vmatprep.subr.mxu0 0.0
  %302 = vmatpush1.msra.mxu0 %v270
  %303 = vmatprep.subr.mxu0 0.0
  %304 = vmatpush1.msra.mxu0 %v269
  %305 = vmatprep.subr.mxu0 0.0
  %306 = vmatpush1.msra.mxu0 %v268
  %307 = vmatprep.subr.mxu0 0.0
  %308 = vmatpush1.msra.mxu0 %v267
  %309 = vmatprep.subr.mxu0 0.0
  %310 = vmatpush1.msra.mxu0 %v266
  %311 = vmatprep.subr.mxu0 0.0
  %312 = vmatpush1.msra.mxu0 %v265
  %313 = vmatprep.subr.mxu0 0.0
  %314 = vmatpush2.msra.mxu0 0.0
  %315 = vmatprep.subr.mxu0 0.0
  %316 = vmatpush2.msra.mxu0 0.0
  %317 = vmatprep.subr.mxu0 0.0
  %318 = vmatpush2.msra.mxu0 0.0
  %319 = vmatprep.subr.mxu0 0.0
  %320 = vmatpush2.msra.mxu0 0.0
  %321 = vmatprep.subr.mxu0 0.0
  %322 = vmatpush2.msra.mxu0 0.0
  %323 = vmatprep.subr.mxu0 0.0
  %324 = vmatpush2.msra.mxu0 0.0
  %325 = vmatprep.subr.mxu0 0.0
  %326 = vmatpush2.msra.mxu0 0.0
  %327 = vmatprep.subr.mxu0 0.0
  %328 = vmatpush2.msra.mxu0 0.0
  %329 = vmatprep.subr.mxu0 0.0
  %330 = vmatpush2.msra.mxu0 0.0
  %331 = vmatprep.subr.mxu0 0.0
  %332 = vmatpush2.msra.mxu0 0.0
  %333 = vmatprep.subr.mxu0 0.0
  %334 = vmatpush2.msra.mxu0 0.0
  %335 = vmatprep.subr.mxu0 0.0
  %336 = vmatpush2.msra.mxu0 0.0
  %337 = vmatprep.subr.mxu0 0.0
  %338 = vmatpush2.msra.mxu0 0.0
  %339 = vmatprep.subr.mxu0 0.0
  %340 = vmatpush2.msra.mxu0 0.0
  %341 = vmatprep.subr.mxu0 0.0
  %342 = vmatpush2.msra.mxu0 0.0
  %343 = vmatprep.subr.mxu0 0.0
  %344 = vmatpush2.msra.mxu0 0.0
  %345 = vmatprep.mubr.f32.mxu0 0.0
  %346 = vmatmul.mubr.f32.gmra.mxu0 %v261
  %v347 = vpop.f32.mrf.mxu0
  %v348 = vadd.f32 0.0, %v347
  %v349 = vpop.f32.mrf.mxu0
  %350 = vdwg.mxu0
  %v351 = vadd.f32 %v264, %v348
  %v352 = vtanh.pop %v351
  %353 = vst [vmem:[%s263] sm:$0xff] %v352
  %s354 = scalar_lea.vmem [#allocation2], 16
  %v355 = vld [vmem:[%s354] sm:$0xff]
  %v356 = vld [vmem:[%s2] sm:$0xff]
  %v357 = vld [vmem:[%s2 + $0x8] sm:$0xff]
  %v358 = vld [vmem:[%s2 + $0x10] sm:$0xff]
  %v359 = vld [vmem:[%s2 + $0x18] sm:$0xff]
  %v360 = vld [vmem:[%s2 + $0x20] sm:$0xff]
  %v361 = vld [vmem:[%s2 + $0x28] sm:$0xff]
  %v362 = vld [vmem:[%s2 + $0x30] sm:$0xff]
  %v363 = vld [vmem:[%s2 + $0x38] sm:$0xff]
  %v364 = vld [vmem:[%s2 + $0x40] sm:$0xff]
  %v365 = vld [vmem:[%s2 + $0x48] sm:$0xff]
  %v366 = vld [vmem:[%s2 + $0x50] sm:$0xff]
  %v367 = vld [vmem:[%s2 + $0x58] sm:$0xff]
  %v368 = vld [vmem:[%s2 + $0x60] sm:$0xff]
  %v369 = vld [vmem:[%s2 + $0x68] sm:$0xff]
  %v370 = vld [vmem:[%s2 + $0x70] sm:$0xff]
  %v371 = vld [vmem:[%s2 + $0x78] sm:$0xff]
  %372 = vmatprep.subr.mxu0 0.0
  %373 = vmatpush1.msra.mxu0 %v371
  %374 = vmatprep.subr.mxu0 0.0
  %375 = vmatpush1.msra.mxu0 %v370
  %376 = vmatprep.subr.mxu0 0.0
  %377 = vmatpush1.msra.mxu0 %v369
  %378 = vmatprep.subr.mxu0 0.0
  %379 = vmatpush1.msra.mxu0 %v368
  %380 = vmatprep.subr.mxu0 0.0
  %381 = vmatpush1.msra.mxu0 %v367
  %382 = vmatprep.subr.mxu0 0.0
  %383 = vmatpush1.msra.mxu0 %v366
  %384 = vmatprep.subr.mxu0 0.0
  %385 = vmatpush1.msra.mxu0 %v365
  %386 = vmatprep.subr.mxu0 0.0
  %387 = vmatpush1.msra.mxu0 %v364
  %388 = vmatprep.subr.mxu0 0.0
  %389 = vmatpush1.msra.mxu0 %v363
  %390 = vmatprep.subr.mxu0 0.0
  %391 = vmatpush1.msra.mxu0 %v362
  %392 = vmatprep.subr.mxu0 0.0
  %393 = vmatpush1.msra.mxu0 %v361
  %394 = vmatprep.subr.mxu0 0.0
  %395 = vmatpush1.msra.mxu0 %v360
  %396 = vmatprep.subr.mxu0 0.0
  %397 = vmatpush1.msra.mxu0 %v359
  %398 = vmatprep.subr.mxu0 0.0
  %399 = vmatpush1.msra.mxu0 %v358
  %400 = vmatprep.subr.mxu0 0.0
  %401 = vmatpush1.msra.mxu0 %v357
  %402 = vmatprep.subr.mxu0 0.0
  %403 = vmatpush1.msra.mxu0 %v356
  %404 = vmatprep.subr.mxu0 0.0
  %405 = vmatpush2.msra.mxu0 0.0
  %406 = vmatprep.subr.mxu0 0.0
  %407 = vmatpush2.msra.mxu0 0.0
  %408 = vmatprep.subr.mxu0 0.0
  %409 = vmatpush2.msra.mxu0 0.0
  %410 = vmatprep.subr.mxu0 0.0
  %411 = vmatpush2.msra.mxu0 0.0
  %412 = vmatprep.subr.mxu0 0.0
  %413 = vmatpush2.msra.mxu0 0.0
  %414 = vmatprep.subr.mxu0 0.0
  %415 = vmatpush2.msra.mxu0 0.0
  %416 = vmatprep.subr.mxu0 0.0
  %417 = vmatpush2.msra.mxu0 0.0
  %418 = vmatprep.subr.mxu0 0.0
  %419 = vmatpush2.msra.mxu0 0.0
  %420 = vmatprep.subr.mxu0 0.0
  %421 = vmatpush2.msra.mxu0 0.0
  %422 = vmatprep.subr.mxu0 0.0
  %423 = vmatpush2.msra.mxu0 0.0
  %424 = vmatprep.subr.mxu0 0.0
  %425 = vmatpush2.msra.mxu0 0.0
  %426 = vmatprep.subr.mxu0 0.0
  %427 = vmatpush2.msra.mxu0 0.0
  %428 = vmatprep.subr.mxu0 0.0
  %429 = vmatpush2.msra.mxu0 0.0
  %430 = vmatprep.subr.mxu0 0.0
  %431 = vmatpush2.msra.mxu0 0.0
  %432 = vmatprep.subr.mxu0 0.0
  %433 = vmatpush2.msra.mxu0 0.0
  %434 = vmatprep.subr.mxu0 0.0
  %435 = vmatpush2.msra.mxu0 0.0
  %436 = vmatprep.mubr.f32.mxu0 0.0
  %437 = vmatmul.mubr.f32.gmra.mxu0 %v352
  %v438 = vpop.f32.mrf.mxu0
  %v439 = vadd.f32 0.0, %v438
  %v440 = vpop.f32.mrf.mxu0
  %441 = vdwg.mxu0
  %v442 = vadd.f32 %v355, %v439
  %v443 = vtanh.pop %v442
  %444 = vst [vmem:[%s354] sm:$0xff] %v443
  %s445 = scalar_lea.vmem [#allocation2], 24
  %v446 = vld [vmem:[%s445] sm:$0xff]
  %v447 = vld [vmem:[%s2] sm:$0xff]
  %v448 = vld [vmem:[%s2 + $0x8] sm:$0xff]
  %v449 = vld [vmem:[%s2 + $0x10] sm:$0xff]
  %v450 = vld [vmem:[%s2 + $0x18] sm:$0xff]
  %v451 = vld [vmem:[%s2 + $0x20] sm:$0xff]
  %v452 = vld [vmem:[%s2 + $0x28] sm:$0xff]
  %v453 = vld [vmem:[%s2 + $0x30] sm:$0xff]
  %v454 = vld [vmem:[%s2 + $0x38] sm:$0xff]
  %v455 = vld [vmem:[%s2 + $0x40] sm:$0xff]
  %v456 = vld [vmem:[%s2 + $0x48] sm:$0xff]
  %v457 = vld [vmem:[%s2 + $0x50] sm:$0xff]
  %v458 = vld [vmem:[%s2 + $0x58] sm:$0xff]
  %v459 = vld [vmem:[%s2 + $0x60] sm:$0xff]
  %v460 = vld [vmem:[%s2 + $0x68] sm:$0xff]
  %v461 = vld [vmem:[%s2 + $0x70] sm:$0xff]
  %v462 = vld [vmem:[%s2 + $0x78] sm:$0xff]
  %463 = vmatprep.subr.mxu0 0.0
  %464 = vmatpush1.msra.mxu0 %v462
  %465 = vmatprep.subr.mxu0 0.0
  %466 = vmatpush1.msra.mxu0 %v461
  %467 = vmatprep.subr.mxu0 0.0
  %468 = vmatpush1.msra.mxu0 %v460
  %469 = vmatprep.subr.mxu0 0.0
  %470 = vmatpush1.msra.mxu0 %v459
  %471 = vmatprep.subr.mxu0 0.0
  %472 = vmatpush1.msra.mxu0 %v458
  %473 = vmatprep.subr.mxu0 0.0
  %474 = vmatpush1.msra.mxu0 %v457
  %475 = vmatprep.subr.mxu0 0.0
  %476 = vmatpush1.msra.mxu0 %v456
  %477 = vmatprep.subr.mxu0 0.0
  %478 = vmatpush1.msra.mxu0 %v455
  %479 = vmatprep.subr.mxu0 0.0
  %480 = vmatpush1.msra.mxu0 %v454
  %481 = vmatprep.subr.mxu0 0.0
  %482 = vmatpush1.msra.mxu0 %v453
  %483 = vmatprep.subr.mxu0 0.0
  %484 = vmatpush1.msra.mxu0 %v452
  %485 = vmatprep.subr.mxu0 0.0
  %486 = vmatpush1.msra.mxu0 %v451
  %487 = vmatprep.subr.mxu0 0.0
  %488 = vmatpush1.msra.mxu0 %v450
  %489 = vmatprep.subr.mxu0 0.0
  %490 = vmatpush1.msra.mxu0 %v449
  %491 = vmatprep.subr.mxu0 0.0
  %492 = vmatpush1.msra.mxu0 %v448
  %493 = vmatprep.subr.mxu0 0.0
  %494 = vmatpush1.msra.mxu0 %v447
  %495 = vmatprep.subr.mxu0 0.0
  %496 = vmatpush2.msra.mxu0 0.0
  %497 = vmatprep.subr.mxu0 0.0
  %498 = vmatpush2.msra.mxu0 0.0
  %499 = vmatprep.subr.mxu0 0.0
  %500 = vmatpush2.msra.mxu0 0.0
  %501 = vmatprep.subr.mxu0 0.0
  %502 = vmatpush2.msra.mxu0 0.0
  %503 = vmatprep.subr.mxu0 0.0
  %504 = vmatpush2.msra.mxu0 0.0
  %505 = vmatprep.subr.mxu0 0.0
  %506 = vmatpush2.msra.mxu0 0.0
  %507 = vmatprep.subr.mxu0 0.0
  %508 = vmatpush2.msra.mxu0 0.0
  %509 = vmatprep.subr.mxu0 0.0
  %510 = vmatpush2.msra.mxu0 0.0
  %511 = vmatprep.subr.mxu0 0.0
  %512 = vmatpush2.msra.mxu0 0.0
  %513 = vmatprep.subr.mxu0 0.0
  %514 = vmatpush2.msra.mxu0 0.0
  %515 = vmatprep.subr.mxu0 0.0
  %516 = vmatpush2.msra.mxu0 0.0
  %517 = vmatprep.subr.mxu0 0.0
  %518 = vmatpush2.msra.mxu0 0.0
  %519 = vmatprep.subr.mxu0 0.0
  %520 = vmatpush2.msra.mxu0 0.0
  %521 = vmatprep.subr.mxu0 0.0
  %522 = vmatpush2.msra.mxu0 0.0
  %523 = vmatprep.subr.mxu0 0.0
  %524 = vmatpush2.msra.mxu0 0.0
  %525 = vmatprep.subr.mxu0 0.0
  %526 = vmatpush2.msra.mxu0 0.0
  %527 = vmatprep.mubr.f32.mxu0 0.0
  %528 = vmatmul.mubr.f32.gmra.mxu0 %v443
  %v529 = vpop.f32.mrf.mxu0
  %v530 = vadd.f32 0.0, %v529
  %v531 = vpop.f32.mrf.mxu0
  %532 = vdwg.mxu0
  %v533 = vadd.f32 %v446, %v530
  %v534 = vtanh.pop %v533
  %535 = vst [vmem:[%s445] sm:$0xff] %v534
  %s536 = scalar_lea.vmem [#allocation2], 32
  %v537 = vld [vmem:[%s536] sm:$0xff]
  %v538 = vld [vmem:[%s2] sm:$0xff]
  %v539 = vld [vmem:[%s2 + $0x8] sm:$0xff]
  %v540 = vld [vmem:[%s2 + $0x10] sm:$0xff]
  %v541 = vld [vmem:[%s2 + $0x18] sm:$0xff]
  %v542 = vld [vmem:[%s2 + $0x20] sm:$0xff]
  %v543 = vld [vmem:[%s2 + $0x28] sm:$0xff]
  %v544 = vld [vmem:[%s2 + $0x30] sm:$0xff]
  %v545 = vld [vmem:[%s2 + $0x38] sm:$0xff]
  %v546 = vld [vmem:[%s2 + $0x40] sm:$0xff]
  %v547 = vld [vmem:[%s2 + $0x48] sm:$0xff]
  %v548 = vld [vmem:[%s2 + $0x50] sm:$0xff]
  %v549 = vld [vmem:[%s2 + $0x58] sm:$0xff]
  %v550 = vld [vmem:[%s2 + $0x60] sm:$0xff]
  %v551 = vld [vmem:[%s2 + $0x68] sm:$0xff]
  %v552 = vld [vmem:[%s2 + $0x70] sm:$0xff]
  %v553 = vld [vmem:[%s2 + $0x78] sm:$0xff]
  %554 = vmatprep.subr.mxu0 0.0
  %555 = vmatpush1.msra.mxu0 %v553
  %556 = vmatprep.subr.mxu0 0.0
  %557 = vmatpush1.msra.mxu0 %v552
  %558 = vmatprep.subr.mxu0 0.0
  %559 = vmatpush1.msra.mxu0 %v551
  %560 = vmatprep.subr.mxu0 0.0
  %561 = vmatpush1.msra.mxu0 %v550
  %562 = vmatprep.subr.mxu0 0.0
  %563 = vmatpush1.msra.mxu0 %v549
  %564 = vmatprep.subr.mxu0 0.0
  %565 = vmatpush1.msra.mxu0 %v548
  %566 = vmatprep.subr.mxu0 0.0
  %567 = vmatpush1.msra.mxu0 %v547
  %568 = vmatprep.subr.mxu0 0.0
  %569 = vmatpush1.msra.mxu0 %v546
  %570 = vmatprep.subr.mxu0 0.0
  %571 = vmatpush1.msra.mxu0 %v545
  %572 = vmatprep.subr.mxu0 0.0
  %573 = vmatpush1.msra.mxu0 %v544
  %574 = vmatprep.subr.mxu0 0.0
  %575 = vmatpush1.msra.mxu0 %v543
  %576 = vmatprep.subr.mxu0 0.0
  %577 = vmatpush1.msra.mxu0 %v542
  %578 = vmatprep.subr.mxu0 0.0
  %579 = vmatpush1.msra.mxu0 %v541
  %580 = vmatprep.subr.mxu0 0.0
  %581 = vmatpush1.msra.mxu0 %v540
  %582 = vmatprep.subr.mxu0 0.0
  %583 = vmatpush1.msra.mxu0 %v539
  %584 = vmatprep.subr.mxu0 0.0
  %585 = vmatpush1.msra.mxu0 %v538
  %586 = vmatprep.subr.mxu0 0.0
  %587 = vmatpush2.msra.mxu0 0.0
  %588 = vmatprep.subr.mxu0 0.0
  %589 = vmatpush2.msra.mxu0 0.0
  %590 = vmatprep.subr.mxu0 0.0
  %591 = vmatpush2.msra.mxu0 0.0
  %592 = vmatprep.subr.mxu0 0.0
  %593 = vmatpush2.msra.mxu0 0.0
  %594 = vmatprep.subr.mxu0 0.0
  %595 = vmatpush2.msra.mxu0 0.0
  %596 = vmatprep.subr.mxu0 0.0
  %597 = vmatpush2.msra.mxu0 0.0
  %598 = vmatprep.subr.mxu0 0.0
  %599 = vmatpush2.msra.mxu0 0.0
  %600 = vmatprep.subr.mxu0 0.0
  %601 = vmatpush2.msra.mxu0 0.0
  %602 = vmatprep.subr.mxu0 0.0
  %603 = vmatpush2.msra.mxu0 0.0
  %604 = vmatprep.subr.mxu0 0.0
  %605 = vmatpush2.msra.mxu0 0.0
  %606 = vmatprep.subr.mxu0 0.0
  %607 = vmatpush2.msra.mxu0 0.0
  %608 = vmatprep.subr.mxu0 0.0
  %609 = vmatpush2.msra.mxu0 0.0
  %610 = vmatprep.subr.mxu0 0.0
  %611 = vmatpush2.msra.mxu0 0.0
  %612 = vmatprep.subr.mxu0 0.0
  %613 = vmatpush2.msra.mxu0 0.0
  %614 = vmatprep.subr.mxu0 0.0
  %615 = vmatpush2.msra.mxu0 0.0
  %616 = vmatprep.subr.mxu0 0.0
  %617 = vmatpush2.msra.mxu0 0.0
  %618 = vmatprep.mubr.f32.mxu0 0.0
  %619 = vmatmul.mubr.f32.gmra.mxu0 %v534
  %v620 = vpop.f32.mrf.mxu0
  %v621 = vadd.f32 0.0, %v620
  %v622 = vpop.f32.mrf.mxu0
  %623 = vdwg.mxu0
  %v624 = vadd.f32 %v537, %v621
  %v625 = vtanh.pop %v624
  %626 = vst [vmem:[%s536] sm:$0xff] %v625
  %s627 = scalar_lea.vmem [#allocation2], 40
  %v628 = vld [vmem:[%s627] sm:$0xff]
  %v629 = vld [vmem:[%s2] sm:$0xff]
  %v630 = vld [vmem:[%s2 + $0x8] sm:$0xff]
  %v631 = vld [vmem:[%s2 + $0x10] sm:$0xff]
  %v632 = vld [vmem:[%s2 + $0x18] sm:$0xff]
  %v633 = vld [vmem:[%s2 + $0x20] sm:$0xff]
  %v634 = vld [vmem:[%s2 + $0x28] sm:$0xff]
  %v635 = vld [vmem:[%s2 + $0x30] sm:$0xff]
  %v636 = vld [vmem:[%s2 + $0x38] sm:$0xff]
  %v637 = vld [vmem:[%s2 + $0x40] sm:$0xff]
  %v638 = vld [vmem:[%s2 + $0x48] sm:$0xff]
  %v639 = vld [vmem:[%s2 + $0x50] sm:$0xff]
  %v640 = vld [vmem:[%s2 + $0x58] sm:$0xff]
  %v641 = vld [vmem:[%s2 + $0x60] sm:$0xff]
  %v642 = vld [vmem:[%s2 + $0x68] sm:$0xff]
  %v643 = vld [vmem:[%s2 + $0x70] sm:$0xff]
  %v644 = vld [vmem:[%s2 + $0x78] sm:$0xff]
  %645 = vmatprep.subr.mxu0 0.0
  %646 = vmatpush1.msra.mxu0 %v644
  %647 = vmatprep.subr.mxu0 0.0
  %648 = vmatpush1.msra.mxu0 %v643
  %649 = vmatprep.subr.mxu0 0.0
  %650 = vmatpush1.msra.mxu0 %v642
  %651 = vmatprep.subr.mxu0 0.0
  %652 = vmatpush1.msra.mxu0 %v641
  %653 = vmatprep.subr.mxu0 0.0
  %654 = vmatpush1.msra.mxu0 %v640
  %655 = vmatprep.subr.mxu0 0.0
  %656 = vmatpush1.msra.mxu0 %v639
  %657 = vmatprep.subr.mxu0 0.0
  %658 = vmatpush1.msra.mxu0 %v638
  %659 = vmatprep.subr.mxu0 0.0
  %660 = vmatpush1.msra.mxu0 %v637
  %661 = vmatprep.subr.mxu0 0.0
  %662 = vmatpush1.msra.mxu0 %v636
  %663 = vmatprep.subr.mxu0 0.0
  %664 = vmatpush1.msra.mxu0 %v635
  %665 = vmatprep.subr.mxu0 0.0
  %666 = vmatpush1.msra.mxu0 %v634
  %667 = vmatprep.subr.mxu0 0.0
  %668 = vmatpush1.msra.mxu0 %v633
  %669 = vmatprep.subr.mxu0 0.0
  %670 = vmatpush1.msra.mxu0 %v632
  %671 = vmatprep.subr.mxu0 0.0
  %672 = vmatpush1.msra.mxu0 %v631
  %673 = vmatprep.subr.mxu0 0.0
  %674 = vmatpush1.msra.mxu0 %v630
  %675 = vmatprep.subr.mxu0 0.0
  %676 = vmatpush1.msra.mxu0 %v629
  %677 = vmatprep.subr.mxu0 0.0
  %678 = vmatpush2.msra.mxu0 0.0
  %679 = vmatprep.subr.mxu0 0.0
  %680 = vmatpush2.msra.mxu0 0.0
  %681 = vmatprep.subr.mxu0 0.0
  %682 = vmatpush2.msra.mxu0 0.0
  %683 = vmatprep.subr.mxu0 0.0
  %684 = vmatpush2.msra.mxu0 0.0
  %685 = vmatprep.subr.mxu0 0.0
  %686 = vmatpush2.msra.mxu0 0.0
  %687 = vmatprep.subr.mxu0 0.0
  %688 = vmatpush2.msra.mxu0 0.0
  %689 = vmatprep.subr.mxu0 0.0
  %690 = vmatpush2.msra.mxu0 0.0
  %691 = vmatprep.subr.mxu0 0.0
  %692 = vmatpush2.msra.mxu0 0.0
  %693 = vmatprep.subr.mxu0 0.0
  %694 = vmatpush2.msra.mxu0 0.0
  %695 = vmatprep.subr.mxu0 0.0
  %696 = vmatpush2.msra.mxu0 0.0
  %697 = vmatprep.subr.mxu0 0.0
  %698 = vmatpush2.msra.mxu0 0.0
  %699 = vmatprep.subr.mxu0 0.0
  %700 = vmatpush2.msra.mxu0 0.0
  %701 = vmatprep.subr.mxu0 0.0
  %702 = vmatpush2.msra.mxu0 0.0
  %703 = vmatprep.subr.mxu0 0.0
  %704 = vmatpush2.msra.mxu0 0.0
  %705 = vmatprep.subr.mxu0 0.0
  %706 = vmatpush2.msra.mxu0 0.0
  %707 = vmatprep.subr.mxu0 0.0
  %708 = vmatpush2.msra.mxu0 0.0
  %709 = vmatprep.mubr.f32.mxu0 0.0
  %710 = vmatmul.mubr.f32.gmra.mxu0 %v625
  %v711 = vpop.f32.mrf.mxu0
  %v712 = vadd.f32 0.0, %v711
  %v713 = vpop.f32.mrf.mxu0
  %714 = vdwg.mxu0
  %v715 = vadd.f32 %v628, %v712
  %v716 = vtanh.pop %v715
  %717 = vst [vmem:[%s627] sm:$0xff] %v716
  %s718 = scalar_lea.vmem [#allocation2], 48
  %v719 = vld [vmem:[%s718] sm:$0xff]
  %v720 = vld [vmem:[%s2] sm:$0xff]
  %v721 = vld [vmem:[%s2 + $0x8] sm:$0xff]
  %v722 = vld [vmem:[%s2 + $0x10] sm:$0xff]
  %v723 = vld [vmem:[%s2 + $0x18] sm:$0xff]
  %v724 = vld [vmem:[%s2 + $0x20] sm:$0xff]
  %v725 = vld [vmem:[%s2 + $0x28] sm:$0xff]
  %v726 = vld [vmem:[%s2 + $0x30] sm:$0xff]
  %v727 = vld [vmem:[%s2 + $0x38] sm:$0xff]
  %v728 = vld [vmem:[%s2 + $0x40] sm:$0xff]
  %v729 = vld [vmem:[%s2 + $0x48] sm:$0xff]
  %v730 = vld [vmem:[%s2 + $0x50] sm:$0xff]
  %v731 = vld [vmem:[%s2 + $0x58] sm:$0xff]
  %v732 = vld [vmem:[%s2 + $0x60] sm:$0xff]
  %v733 = vld [vmem:[%s2 + $0x68] sm:$0xff]
  %v734 = vld [vmem:[%s2 + $0x70] sm:$0xff]
  %v735 = vld [vmem:[%s2 + $0x78] sm:$0xff]
  %736 = vmatprep.subr.mxu0 0.0
  %737 = vmatpush1.msra.mxu0 %v735
  %738 = vmatprep.subr.mxu0 0.0
  %739 = vmatpush1.msra.mxu0 %v734
  %740 = vmatprep.subr.mxu0 0.0
  %741 = vmatpush1.msra.mxu0 %v733
  %742 = vmatprep.subr.mxu0 0.0
  %743 = vmatpush1.msra.mxu0 %v732
  %744 = vmatprep.subr.mxu0 0.0
  %745 = vmatpush1.msra.mxu0 %v731
  %746 = vmatprep.subr.mxu0 0.0
  %747 = vmatpush1.msra.mxu0 %v730
  %748 = vmatprep.subr.mxu0 0.0
  %749 = vmatpush1.msra.mxu0 %v729
  %750 = vmatprep.subr.mxu0 0.0
  %751 = vmatpush1.msra.mxu0 %v728
  %752 = vmatprep.subr.mxu0 0.0
  %753 = vmatpush1.msra.mxu0 %v727
  %754 = vmatprep.subr.mxu0 0.0
  %755 = vmatpush1.msra.mxu0 %v726
  %756 = vmatprep.subr.mxu0 0.0
  %757 = vmatpush1.msra.mxu0 %v725
  %758 = vmatprep.subr.mxu0 0.0
  %759 = vmatpush1.msra.mxu0 %v724
  %760 = vmatprep.subr.mxu0 0.0
  %761 = vmatpush1.msra.mxu0 %v723
  %762 = vmatprep.subr.mxu0 0.0
  %763 = vmatpush1.msra.mxu0 %v722
  %764 = vmatprep.subr.mxu0 0.0
  %765 = vmatpush1.msra.mxu0 %v721
  %766 = vmatprep.subr.mxu0 0.0
  %767 = vmatpush1.msra.mxu0 %v720
  %768 = vmatprep.subr.mxu0 0.0
  %769 = vmatpush2.msra.mxu0 0.0
  %770 = vmatprep.subr.mxu0 0.0
  %771 = vmatpush2.msra.mxu0 0.0
  %772 = vmatprep.subr.mxu0 0.0
  %773 = vmatpush2.msra.mxu0 0.0
  %774 = vmatprep.subr.mxu0 0.0
  %775 = vmatpush2.msra.mxu0 0.0
  %776 = vmatprep.subr.mxu0 0.0
  %777 = vmatpush2.msra.mxu0 0.0
  %778 = vmatprep.subr.mxu0 0.0
  %779 = vmatpush2.msra.mxu0 0.0
  %780 = vmatprep.subr.mxu0 0.0
  %781 = vmatpush2.msra.mxu0 0.0
  %782 = vmatprep.subr.mxu0 0.0
  %783 = vmatpush2.msra.mxu0 0.0
  %784 = vmatprep.subr.mxu0 0.0
  %785 = vmatpush2.msra.mxu0 0.0
  %786 = vmatprep.subr.mxu0 0.0
  %787 = vmatpush2.msra.mxu0 0.0
  %788 = vmatprep.subr.mxu0 0.0
  %789 = vmatpush2.msra.mxu0 0.0
  %790 = vmatprep.subr.mxu0 0.0
  %791 = vmatpush2.msra.mxu0 0.0
  %792 = vmatprep.subr.mxu0 0.0
  %793 = vmatpush2.msra.mxu0 0.0
  %794 = vmatprep.subr.mxu0 0.0
  %795 = vmatpush2.msra.mxu0 0.0
  %796 = vmatprep.subr.mxu0 0.0
  %797 = vmatpush2.msra.mxu0 0.0
  %798 = vmatprep.subr.mxu0 0.0
  %799 = vmatpush2.msra.mxu0 0.0
  %800 = vmatprep.mubr.f32.mxu0 0.0
  %801 = vmatmul.mubr.f32.gmra.mxu0 %v716
  %v802 = vpop.f32.mrf.mxu0
  %v803 = vadd.f32 0.0, %v802
  %v804 = vpop.f32.mrf.mxu0
  %805 = vdwg.mxu0
  %v806 = vadd.f32 %v719, %v803
  %v807 = vtanh.pop %v806
  %808 = vst [vmem:[%s718] sm:$0xff] %v807
  %s809 = scalar_lea.vmem [#allocation2], 56
  %v810 = vld [vmem:[%s809] sm:$0xff]
  %v811 = vld [vmem:[%s2] sm:$0xff]
  %v812 = vld [vmem:[%s2 + $0x8] sm:$0xff]
  %v813 = vld [vmem:[%s2 + $0x10] sm:$0xff]
  %v814 = vld [vmem:[%s2 + $0x18] sm:$0xff]
  %v815 = vld [vmem:[%s2 + $0x20] sm:$0xff]
  %v816 = vld [vmem:[%s2 + $0x28] sm:$0xff]
  %v817 = vld [vmem:[%s2 + $0x30] sm:$0xff]
  %v818 = vld [vmem:[%s2 + $0x38] sm:$0xff]
  %v819 = vld [vmem:[%s2 + $0x40] sm:$0xff]
  %v820 = vld [vmem:[%s2 + $0x48] sm:$0xff]
  %v821 = vld [vmem:[%s2 + $0x50] sm:$0xff]
  %v822 = vld [vmem:[%s2 + $0x58] sm:$0xff]
  %v823 = vld [vmem:[%s2 + $0x60] sm:$0xff]
  %v824 = vld [vmem:[%s2 + $0x68] sm:$0xff]
  %v825 = vld [vmem:[%s2 + $0x70] sm:$0xff]
  %v826 = vld [vmem:[%s2 + $0x78] sm:$0xff]
  %827 = vmatprep.subr.mxu0 0.0
  %828 = vmatpush1.msra.mxu0 %v826
  %829 = vmatprep.subr.mxu0 0.0
  %830 = vmatpush1.msra.mxu0 %v825
  %831 = vmatprep.subr.mxu0 0.0
  %832 = vmatpush1.msra.mxu0 %v824
  %833 = vmatprep.subr.mxu0 0.0
  %834 = vmatpush1.msra.mxu0 %v823
  %835 = vmatprep.subr.mxu0 0.0
  %836 = vmatpush1.msra.mxu0 %v822
  %837 = vmatprep.subr.mxu0 0.0
  %838 = vmatpush1.msra.mxu0 %v821
  %839 = vmatprep.subr.mxu0 0.0
  %840 = vmatpush1.msra.mxu0 %v820
  %841 = vmatprep.subr.mxu0 0.0
  %842 = vmatpush1.msra.mxu0 %v819
  %843 = vmatprep.subr.mxu0 0.0
  %844 = vmatpush1.msra.mxu0 %v818
  %845 = vmatprep.subr.mxu0 0.0
  %846 = vmatpush1.msra.mxu0 %v817
  %847 = vmatprep.subr.mxu0 0.0
  %848 = vmatpush1.msra.mxu0 %v816
  %849 = vmatprep.subr.mxu0 0.0
  %850 = vmatpush1.msra.mxu0 %v815
  %851 = vmatprep.subr.mxu0 0.0
  %852 = vmatpush1.msra.mxu0 %v814
  %853 = vmatprep.subr.mxu0 0.0
  %854 = vmatpush1.msra.mxu0 %v813
  %855 = vmatprep.subr.mxu0 0.0
  %856 = vmatpush1.msra.mxu0 %v812
  %857 = vmatprep.subr.mxu0 0.0
  %858 = vmatpush1.msra.mxu0 %v811
  %859 = vmatprep.subr.mxu0 0.0
  %860 = vmatpush2.msra.mxu0 0.0
  %861 = vmatprep.subr.mxu0 0.0
  %862 = vmatpush2.msra.mxu0 0.0
  %863 = vmatprep.subr.mxu0 0.0
  %864 = vmatpush2.msra.mxu0 0.0
  %865 = vmatprep.subr.mxu0 0.0
  %866 = vmatpush2.msra.mxu0 0.0
  %867 = vmatprep.subr.mxu0 0.0
  %868 = vmatpush2.msra.mxu0 0.0
  %869 = vmatprep.subr.mxu0 0.0
  %870 = vmatpush2.msra.mxu0 0.0
  %871 = vmatprep.subr.mxu0 0.0
  %872 = vmatpush2.msra.mxu0 0.0
  %873 = vmatprep.subr.mxu0 0.0
  %874 = vmatpush2.msra.mxu0 0.0
  %875 = vmatprep.subr.mxu0 0.0
  %876 = vmatpush2.msra.mxu0 0.0
  %877 = vmatprep.subr.mxu0 0.0
  %878 = vmatpush2.msra.mxu0 0.0
  %879 = vmatprep.subr.mxu0 0.0
  %880 = vmatpush2.msra.mxu0 0.0
  %881 = vmatprep.subr.mxu0 0.0
  %882 = vmatpush2.msra.mxu0 0.0
  %883 = vmatprep.subr.mxu0 0.0
  %884 = vmatpush2.msra.mxu0 0.0
  %885 = vmatprep.subr.mxu0 0.0
  %886 = vmatpush2.msra.mxu0 0.0
  %887 = vmatprep.subr.mxu0 0.0
  %888 = vmatpush2.msra.mxu0 0.0
  %889 = vmatprep.subr.mxu0 0.0
  %890 = vmatpush2.msra.mxu0 0.0
  %891 = vmatprep.mubr.f32.mxu0 0.0
  %892 = vmatmul.mubr.f32.gmra.mxu0 %v807
  %v893 = vpop.f32.mrf.mxu0
  %v894 = vadd.f32 0.0, %v893
  %v895 = vpop.f32.mrf.mxu0
  %896 = vdwg.mxu0
  %v897 = vadd.f32 %v810, %v894
  %v898 = vtanh.pop %v897
  %899 = vst [vmem:[%s809] sm:$0xff] %v898
  %900 = vst [vmem:[#allocation3] sm:$0xff] %v898
  %v901 = vld [vmem:[#allocation2] sm:$0xff]
  %v902 = vld [vmem:[#allocation2 + $0x8] sm:$0xff]
  %v903 = vld [vmem:[#allocation2 + $0x10] sm:$0xff]
  %v904 = vld [vmem:[#allocation2 + $0x18] sm:$0xff]
  %v905 = vld [vmem:[#allocation2 + $0x20] sm:$0xff]
  %v906 = vld [vmem:[#allocation2 + $0x28] sm:$0xff]
  %v907 = vld [vmem:[#allocation2 + $0x30] sm:$0xff]
  %v908 = vld [vmem:[#allocation2 + $0x38] sm:$0xff]
  %v909 = vld [vmem:[%s4] sm:$0xff]
  %v910 = vld [vmem:[%s4 + $0x8] sm:$0xff]
  %v911 = vld [vmem:[%s4 + $0x10] sm:$0xff]
  %v912 = vld [vmem:[%s4 + $0x18] sm:$0xff]
  %v913 = vld [vmem:[%s4 + $0x20] sm:$0xff]
  %v914 = vld [vmem:[%s4 + $0x28] sm:$0xff]
  %v915 = vld [vmem:[%s4 + $0x30] sm:$0xff]
  %v916 = vld [vmem:[%s4 + $0x38] sm:$0xff]
  %v917 = vld [vmem:[%s4 + $0x40] sm:$0xff]
  %v918 = vld [vmem:[%s4 + $0x48] sm:$0xff]
  %v919 = vld [vmem:[%s4 + $0x50] sm:$0xff]
  %v920 = vld [vmem:[%s4 + $0x58] sm:$0xff]
  %v921 = vld [vmem:[%s4 + $0x60] sm:$0xff]
  %v922 = vld [vmem:[%s4 + $0x68] sm:$0xff]
  %v923 = vld [vmem:[%s4 + $0x70] sm:$0xff]
  %v924 = vld [vmem:[%s4 + $0x78] sm:$0xff]
  %v925 = vld [vmem:[%s5] sm:$0x1]
  %v927 = vlaneseq
  %v928 = vshrl.u32 %v927, 7
  %v929 = vsub.s32 0, %v928
  %v930 = vrot.slane %v925, %v929
  %932 = vmatprep.subr.mxu0 0.0
  %933 = vmatpush1.msra.mxu0 %v924
  %934 = vmatprep.subr.mxu0 0.0
  %935 = vmatpush1.msra.mxu0 %v923
  %936 = vmatprep.subr.mxu0 0.0
  %937 = vmatpush1.msra.mxu0 %v922
  %938 = vmatprep.subr.mxu0 0.0
  %939 = vmatpush1.msra.mxu0 %v921
  %940 = vmatprep.subr.mxu0 0.0
  %941 = vmatpush1.msra.mxu0 %v920
  %942 = vmatprep.subr.mxu0 0.0
  %943 = vmatpush1.msra.mxu0 %v919
  %944 = vmatprep.subr.mxu0 0.0
  %945 = vmatpush1.msra.mxu0 %v918
  %946 = vmatprep.subr.mxu0 0.0
  %947 = vmatpush1.msra.mxu0 %v917
  %948 = vmatprep.subr.mxu0 0.0
  %949 = vmatpush1.msra.mxu0 %v916
  %950 = vmatprep.subr.mxu0 0.0
  %951 = vmatpush1.msra.mxu0 %v915
  %952 = vmatprep.subr.mxu0 0.0
  %953 = vmatpush1.msra.mxu0 %v914
  %954 = vmatprep.subr.mxu0 0.0
  %955 = vmatpush1.msra.mxu0 %v913
  %956 = vmatprep.subr.mxu0 0.0
  %957 = vmatpush1.msra.mxu0 %v912
  %958 = vmatprep.subr.mxu0 0.0
  %959 = vmatpush1.msra.mxu0 %v911
  %960 = vmatprep.subr.mxu0 0.0
  %961 = vmatpush1.msra.mxu0 %v910
  %962 = vmatprep.subr.mxu0 0.0
  %963 = vmatpush1.msra.mxu0 %v909
  %964 = vmatprep.subr.mxu0 0.0
  %965 = vmatpush2.msra.mxu0 0.0
  %966 = vmatprep.subr.mxu0 0.0
  %967 = vmatpush2.msra.mxu0 0.0
  %968 = vmatprep.subr.mxu0 0.0
  %969 = vmatpush2.msra.mxu0 0.0
  %970 = vmatprep.subr.mxu0 0.0
  %971 = vmatpush2.msra.mxu0 0.0
  %972 = vmatprep.subr.mxu0 0.0
  %973 = vmatpush2.msra.mxu0 0.0
  %974 = vmatprep.subr.mxu0 0.0
  %975 = vmatpush2.msra.mxu0 0.0
  %976 = vmatprep.subr.mxu0 0.0
  %977 = vmatpush2.msra.mxu0 0.0
  %978 = vmatprep.subr.mxu0 0.0
  %979 = vmatpush2.msra.mxu0 0.0
  %980 = vmatprep.subr.mxu0 0.0
  %981 = vmatpush2.msra.mxu0 0.0
  %982 = vmatprep.subr.mxu0 0.0
  %983 = vmatpush2.msra.mxu0 0.0
  %984 = vmatprep.subr.mxu0 0.0
  %985 = vmatpush2.msra.mxu0 0.0
  %986 = vmatprep.subr.mxu0 0.0
  %987 = vmatpush2.msra.mxu0 0.0
  %988 = vmatprep.subr.mxu0 0.0
  %989 = vmatpush2.msra.mxu0 0.0
  %990 = vmatprep.subr.mxu0 0.0
  %991 = vmatpush2.msra.mxu0 0.0
  %992 = vmatprep.subr.mxu0 0.0
  %993 = vmatpush2.msra.mxu0 0.0
  %994 = vmatprep.subr.mxu0 0.0
  %995 = vmatpush2.msra.mxu0 0.0
  %996 = vmatprep.mubr.f32.mxu0 0.0
  %997 = vmatmul.mubr.f32.gmra.mxu0 %v901
  %v998 = vpop.f32.mrf.mxu0
  %v999 = vadd.f32 %v930, %v998
  %v1000 = vpop.f32.mrf.mxu0
  %1001 = vmatprep.mubr.f32.mxu0 0.0
  %1002 = vmatmul.mubr.f32.gmra.mxu0 %v902
  %v1003 = vpop.f32.mrf.mxu0
  %v1004 = vadd.f32 %v930, %v1003
  %v1005 = vpop.f32.mrf.mxu0
  %1006 = vmatprep.mubr.f32.mxu0 0.0
  %1007 = vmatmul.mubr.f32.gmra.mxu0 %v903
  %v1008 = vpop.f32.mrf.mxu0
  %v1009 = vadd.f32 %v930, %v1008
  %v1010 = vpop.f32.mrf.mxu0
  %1011 = vmatprep.mubr.f32.mxu0 0.0
  %1012 = vmatmul.mubr.f32.gmra.mxu0 %v904
  %v1013 = vpop.f32.mrf.mxu0
  %v1014 = vadd.f32 %v930, %v1013
  %v1015 = vpop.f32.mrf.mxu0
  %1016 = vmatprep.mubr.f32.mxu0 0.0
  %1017 = vmatmul.mubr.f32.gmra.mxu0 %v905
  %v1018 = vpop.f32.mrf.mxu0
  %v1019 = vadd.f32 %v930, %v1018
  %v1020 = vpop.f32.mrf.mxu0
  %1021 = vmatprep.mubr.f32.mxu0 0.0
  %1022 = vmatmul.mubr.f32.gmra.mxu0 %v906
  %v1023 = vpop.f32.mrf.mxu0
  %v1024 = vadd.f32 %v930, %v1023
  %v1025 = vpop.f32.mrf.mxu0
  %1026 = vmatprep.mubr.f32.mxu0 0.0
  %1027 = vmatmul.mubr.f32.gmra.mxu0 %v907
  %v1028 = vpop.f32.mrf.mxu0
  %v1029 = vadd.f32 %v930, %v1028
  %v1030 = vpop.f32.mrf.mxu0
  %1031 = vmatprep.mubr.f32.mxu0 0.0
  %1032 = vmatmul.mubr.f32.gmra.mxu0 %v908
  %v1033 = vpop.f32.mrf.mxu0
  %v1034 = vadd.f32 %v930, %v1033
  %v1035 = vpop.f32.mrf.mxu0
  %1036 = vdwg.mxu0
  %1037 = vst [vmem:[%s6] sm:$0xff] %v999
  %1038 = vst [vmem:[%s6 + $0x8] sm:$0xff] %v1004
  %1039 = vst [vmem:[%s6 + $0x10] sm:$0xff] %v1009
  %1040 = vst [vmem:[%s6 + $0x18] sm:$0xff] %v1014
  %1041 = vst [vmem:[%s6 + $0x20] sm:$0xff] %v1019
  %1042 = vst [vmem:[%s6 + $0x28] sm:$0xff] %v1024
  %1043 = vst [vmem:[%s6 + $0x30] sm:$0xff] %v1029
  %1044 = vst [vmem:[%s6 + $0x38] sm:$0xff] %v1034
  // Predicated region
  $region30: #{simple_rnn_model.1} parent=0 // pred_check
    _
  $region31: #{simple_rnn_model.1} parent=0 // pred_check_branch
    %1046 = sbr.rel (0) target = $region33
  $region32: #{simple_rnn_model.1} parent=0 // pred_region
    _
  $region33: #{simple_rnn_model.1} parent=0 // pred_fallthru
    _
  // Predicated region
  $region34: #{simple_rnn_model.1} parent=0 // pred_check
    _
  $region35: #{simple_rnn_model.1} parent=0 // pred_check_branch
    %1048 = sbr.rel (0) target = $region37
  $region36: #{simple_rnn_model.1} parent=0 // pred_region
    _
  $region37: #{simple_rnn_model.1} parent=0 // pred_fallthru
    _

</llo_original>
